<compile_context>
chip_gen: v7x
topology: tpu7x:2x2x1
jax: 0.10.0
libtpu: 0.0.40
codegen_flags: <defaults>
</compile_context>

<pallas_src>
import functools
import math

import jax
import jax.numpy as jnp
from jax.experimental import pallas as pl
from jax.experimental.pallas import tpu as pltpu


# ----------------------------- kernel helpers ------------------------------

def _erf(x):
    # Abramowitz & Stegun 7.1.26 polynomial, |err| < 1.5e-7 (f32 roundoff level).
    a1, a2, a3, a4, a5 = 0.254829592, -0.284496736, 1.421413741, -1.453152027, 1.061405429
    p = 0.3275911
    sgn = jnp.where(x >= 0.0, 1.0, -1.0)
    ax = jnp.abs(x)
    # Exact divide kept on purpose: approx EUP reciprocal (~rel 1e-4) amplified
    # through 4 GELUs + 3 convs risks the 1e-3 exact-erf tolerance.
    t = 1.0 / (1.0 + p * ax)
    poly = ((((a5 * t + a4) * t + a3) * t + a2) * t + a1) * t
    return sgn * (1.0 - poly * jnp.exp(-ax * ax))


def _gelu(x):
    # exact (erf-based) GELU, matching torch.nn.GELU() default
    return 0.5 * x * (1.0 + _erf(x * 0.7071067811865476))


def _conv_slab(h, w_flat, b_row, ksize, *, im2col):
    """'valid' (padding=0) conv1d on a flattened (rows, C) slab.

    Every sample occupies a fixed row stride, and a sample's valid output rows
    read only that sample's valid input rows, so ONE slab-wide matmul computes
    all samples' convs at once.  w_flat: (K*C, Cout), row index = k*C + c.
    """
    rows, c = h.shape
    if ksize > 1:
        hp = jnp.concatenate([h, jnp.zeros((ksize - 1, c), h.dtype)], axis=0)
    else:
        hp = h
    if im2col:
        # one deep MXU contraction (best on 256-deep v6e/v7x MXUs)
        cols = jnp.concatenate([hp[k:k + rows, :] for k in range(ksize)], axis=1)
        return jnp.dot(cols, w_flat, preferred_element_type=jnp.float32) + b_row
    # per-tap path (v5e: 128-deep MXU, the lane-concat buys no passes there)
    acc = jnp.dot(hp[0:rows, :], w_flat[0:c, :], preferred_element_type=jnp.float32) + b_row
    for k in range(1, ksize):
        acc = acc + jnp.dot(hp[k:k + rows, :], w_flat[k * c:(k + 1) * c, :],
                            preferred_element_type=jnp.float32)
    return acc


def _window_max(h, pool):
    """Row-window max over `pool` consecutive slab rows; (rows, C) -> (rows, C)."""
    rows, c = h.shape
    if pool > 1:
        hp = jnp.concatenate([h, jnp.zeros((pool - 1, c), h.dtype)], axis=0)
    else:
        hp = h
    wm = hp[0:rows, :]
    for i in range(1, pool):
        wm = jnp.maximum(wm, hp[i:i + rows, :])
    return wm


# --------------------------------- kernel ----------------------------------

def _patch_embed_kernel(x_ref, w0_ref, b0_ref, w1_ref, b1_ref, w2_ref, b2_ref,
                        w3_ref, b3_ref, sel1_ref, sel2_ref, o_ref,
                        *, k1, k2, k3, pool1, pool2, deep_im2col):
    x = x_ref[...]                                                   # (block_b*L, Cin)

    # initial_mapping (Linear, BN1 folded) -> Dropout(eval = id) -> GELU
    h = _gelu(jnp.dot(x, w0_ref[...], preferred_element_type=jnp.float32) + b0_ref[...])

    # block 1: Conv1d(k1, pad=0, BN2 folded) -> GELU  (depth k1*Cmid = 96: one pass)
    h = _gelu(_conv_slab(h, w1_ref[...], b1_ref[...], k1, im2col=True))

    # block 2: Conv1d(k2, pad=0, BN3 folded) -> MaxPool1d(3) -> GELU
    # pool = window-max over shifted slices + hoisted 0/1 row-selection matmul
    # (keeps per-sample row stride; garbage rows are zeroed by the selection).
    h = _conv_slab(h, w2_ref[...], b2_ref[...], k2, im2col=deep_im2col)
    h = _gelu(jnp.dot(sel1_ref[...], _window_max(h, pool1),
                      preferred_element_type=jnp.float32))

    # block 3: Conv1d(k3, pad=0, BN4 folded) -> MaxPool1d(2) -> GELU
    # final selection also compacts samples to lf_pad rows each -> dense store.
    h = _conv_slab(h, w3_ref[...], b3_ref[...], k3, im2col=deep_im2col)
    out = jnp.dot(sel2_ref[...], _window_max(h, pool2),
                  preferred_element_type=jnp.float32)
    o_ref[...] = _gelu(out).astype(o_ref.dtype)


# --------------------------------- wrapper ---------------------------------

def _bn_scale_shift(bn, eps=1e-5):
    gamma, beta, mean, var = bn
    scale = gamma / jnp.sqrt(var + eps)
    shift = beta - mean * scale
    return scale, shift


def _chip_profile():
    """(two_tensorcores_per_chip, use_deep_im2col) from the local device kind."""
    try:
        kind = jax.devices()[0].device_kind.lower()
    except Exception:
        kind = ""
    is_v5e = ("v5" in kind) and (("lite" in kind) or ("v5e" in kind))
    # v4 / v5p (megacore) and v7x have 2 TensorCores per chip; v5e / v6e have 1.
    two_tc = ("v7" in kind) or ("v4" in kind) or (("v5" in kind) and not is_v5e)
    # v5e MXU is 128-deep: the K*C = 384 im2col contraction buys no passes, so
    # use per-tap matmuls there; keep fused im2col on 256-deep v6e/v7x.
    deep_im2col = not is_v5e
    return two_tc, deep_im2col


def _pick_blocking(n, two_tc, block_b_max=8):
    """Generation-aware batch blocking; returns (block_b, grid_steps)."""
    steps = max(1, -(-n // block_b_max))
    if two_tc:
        steps = max(2, steps)          # keep both TensorCores busy
        if steps % 2:
            steps += 1                 # even grid -> balanced TC split
    block_b = max(1, -(-n // steps))
    return block_b, steps


def _pool_select(rows_out, per_out, stride_in, l_valid, pool, rows_in):
    """0/1 selection matrix: out[b*per_out + o] = in[b*stride_in + pool*o] for o < l_valid."""
    q = jnp.arange(rows_out, dtype=jnp.int32)[:, None]
    r = jnp.arange(rows_in, dtype=jnp.int32)[None, :]
    b = q // per_out
    o = q % per_out
    tgt = b * stride_in + pool * o
    return ((r == tgt) & (o < l_valid)).astype(jnp.float32)


def patch_embeddings_forward(x_ncl, params):
    n, c_in, length = x_ncl.shape

    # ---- fold BN(eval) affines into the preceding Linear / Conv weights ----
    s1, t1 = _bn_scale_shift(params["bn1"])
    w0 = jnp.transpose(params["w0"] * s1[:, None]).astype(jnp.float32)   # (Cin, Cmid)
    b0 = (params["b0"] * s1 + t1).reshape(1, -1).astype(jnp.float32)

    def fold_conv(w, b, bn):
        s, t = _bn_scale_shift(bn)
        wf = w * s[:, None, None]                                        # (Cout, Cin, K)
        k = w.shape[2]
        # -> (K, Cin, Cout) -> (K*Cin, Cout); row index = k*Cin + c matches the
        # im2col lane-concat / per-tap slicing order in the kernel.
        wf = jnp.transpose(wf, (2, 1, 0)).reshape(k * w.shape[1], w.shape[0])
        return wf.astype(jnp.float32), (b * s + t).reshape(1, -1).astype(jnp.float32)

    w1, b1 = fold_conv(params["w1"], params["b1"], params["bn2"])
    w2, b2 = fold_conv(params["w2"], params["b2"], params["bn3"])
    w3, b3 = fold_conv(params["w3"], params["b3"], params["bn4"])

    c_out = w1.shape[1]
    k1 = params["w1"].shape[2]
    k2 = params["w2"].shape[2]
    k3 = params["w3"].shape[2]
    l1 = length - (k1 - 1)
    l2 = l1 - (k2 - 1)
    l3 = l2 // 3
    l4 = l3 - (k3 - 1)
    lf = l4 // 2
    assert lf >= 1, "input sequence too short for this stack"

    two_tc, deep_im2col = _chip_profile()
    block_b, steps = _pick_blocking(n, two_tc)
    n_pad = block_b * steps

    stride = length                 # per-sample row stride, constant through the chain
    rows = block_b * stride         # slab rows per grid step
    lf_pad = ((lf + 7) // 8) * 8    # 8-aligned output rows per sample (dense store)

    # channels-last, zero-padded batch, flattened to a (n_pad*L, Cin) slab.
    x_nlc = jnp.transpose(x_ncl, (0, 2, 1)).astype(jnp.float32)
    if n_pad != n:
        x_nlc = jnp.concatenate(
            [x_nlc, jnp.zeros((n_pad - n, length, c_in), jnp.float32)], axis=0)
    x_slab = x_nlc.reshape(n_pad * length, c_in)

    # Hoisted maxpool selection / compaction matrices (built once per call).
    sel1 = _pool_select(rows, stride, stride, l3, 3, rows)               # (rows, rows)
    sel2 = _pool_select(block_b * lf_pad, lf_pad, stride, lf, 2, rows)   # (B*lf_pad, rows)

    weight_args = (w0, b0, w1, b1, w2, b2, w3, b3, sel1, sel2)

    def rep(arr):   # full-array block, same block every grid step (stays resident)
        nd = arr.ndim
        return pl.BlockSpec(arr.shape, lambda i, _nd=nd: (0,) * _nd)

    kernel = functools.partial(_patch_embed_kernel, k1=k1, k2=k2, k3=k3,
                               pool1=3, pool2=2, deep_im2col=deep_im2col)

    grid_spec = pltpu.PrefetchScalarGridSpec(
        num_scalar_prefetch=0,
        grid=(steps,),
        in_specs=[pl.BlockSpec((rows, c_in), lambda i: (i, 0))]
                 + [rep(a) for a in weight_args],
        out_specs=pl.BlockSpec((block_b * lf_pad, c_out), lambda i: (i, 0)),
    )

    out_slab = pl.pallas_call(
        kernel,
        out_shape=jax.ShapeDtypeStruct((n_pad * lf_pad, c_out), jnp.float32),
        grid_spec=grid_spec,
        compiler_params=pltpu.CompilerParams(dimension_semantics=("parallel",)),
    )(x_slab, *weight_args)

    out = out_slab.reshape(n_pad, lf_pad, c_out)[:n, :lf, :]
    return jnp.transpose(out, (0, 2, 1))   # (N, C_out, L_out), like PyTorch


# ----------------------- deterministic parameter init ----------------------

def init_params(key, input_channel=4, out_channels=128, ksize_init=3, ksize=3):
    c_mid = out_channels >> 2
    keys = iter(jax.random.split(key, 24))

    def nrm(shape, scale):
        return scale * jax.random.normal(next(keys), shape, jnp.float32)

    def bn(c):
        gamma = 1.0 + 0.1 * jax.random.normal(next(keys), (c,), jnp.float32)
        beta = 0.1 * jax.random.normal(next(keys), (c,), jnp.float32)
        mean = 0.1 * jax.random.normal(next(keys), (c,), jnp.float32)
        var = jnp.abs(jax.random.normal(next(keys), (c,), jnp.float32)) + 0.5
        return (gamma, beta, mean, var)

    p = {}
    p["w0"] = nrm((c_mid, input_channel), 1.0 / math.sqrt(input_channel))   # nn.Linear
    p["b0"] = nrm((c_mid,), 0.05)
    p["bn1"] = bn(c_mid)
    p["w1"] = nrm((out_channels, c_mid, ksize_init), 1.0 / math.sqrt(c_mid * ksize_init))
    p["b1"] = nrm((out_channels,), 0.05)
    p["bn2"] = bn(out_channels)
    p["w2"] = nrm((out_channels, out_channels, ksize), 1.0 / math.sqrt(out_channels * ksize))
    p["b2"] = nrm((out_channels,), 0.05)
    p["bn3"] = bn(out_channels)
    p["w3"] = nrm((out_channels, out_channels, ksize), 1.0 / math.sqrt(out_channels * ksize))
    p["b3"] = nrm((out_channels,), 0.05)
    p["bn4"] = bn(out_channels)
    return p


# ------------------------------ plain-JAX ref -------------------------------

def reference_forward(x_ncl, params):
    def bn_affine(h, bn, eps=1e-5):
        gamma, beta, mean, var = bn
        s = gamma / jnp.sqrt(var + eps)
        return h * s + (beta - mean * s)

    x = jnp.transpose(x_ncl, (0, 2, 1)).astype(jnp.float32)      # (N, L, Cin)
    h = x @ params["w0"].T + params["b0"]
    h = jax.nn.gelu(bn_affine(h, params["bn1"]), approximate=False)

    def conv(h, w, b):                                           # w: (Cout, Cin, K)
        k_size = w.shape[2]
        lo = h.shape[1] - k_size + 1
        acc = jnp.zeros((h.shape[0], lo, w.shape[0]), jnp.float32)
        for k in range(k_size):
            acc = acc + h[:, k:k + lo, :] @ w[:, :, k].T
        return acc + b

    def maxpool(h, p):
        lo = h.shape[1] // p
        return jnp.max(h[:, :lo * p, :].reshape(h.shape[0], lo, p, h.shape[2]), axis=2)

    h = conv(h, params["w1"], params["b1"])
    h = jax.nn.gelu(bn_affine(h, params["bn2"]), approximate=False)

    h = conv(h, params["w2"], params["b2"])
    h = jax.nn.gelu(maxpool(bn_affine(h, params["bn3"]), 3), approximate=False)

    h = conv(h, params["w3"], params["b3"])
    h = jax.nn.gelu(maxpool(bn_affine(h, params["bn4"]), 2), approximate=False)

    return jnp.transpose(h, (0, 2, 1))                           # (N, Cout, Lf)


# ----------------------------------- main -----------------------------------

if __name__ == "__main__":
    key = jax.random.PRNGKey(0)
    kx, kp = jax.random.split(key)

    # X: (batch=2, input_channel=4, L=16) -- PyTorch NCL conv layout
    x = jax.random.normal(kx, (2, 4, 16), jnp.float32)
    params = init_params(kp, input_channel=4, out_channels=128, ksize_init=3, ksize=3)

    out = patch_embeddings_forward(x, params)
    out = jax.block_until_ready(out)

    ref = jax.block_until_ready(reference_forward(x, params))
    assert out.shape == ref.shape, (out.shape, ref.shape)
    max_err = float(jnp.max(jnp.abs(out - ref)))
    assert max_err < 1e-3, f"max abs error {max_err}"

    print("KERNEL_OK")
</pallas_src>

<mosaic_0001>
module attributes {stable_mosaic.version = 11 : i64} {
  func.func @_patch_embed_kernel(%arg0: i32, %arg1: memref<32x4xf32, #tpu.memory_space<vmem>>, %arg2: memref<4x32xf32, #tpu.memory_space<vmem>>, %arg3: memref<1x32xf32, #tpu.memory_space<vmem>>, %arg4: memref<96x128xf32, #tpu.memory_space<vmem>>, %arg5: memref<1x128xf32, #tpu.memory_space<vmem>>, %arg6: memref<384x128xf32, #tpu.memory_space<vmem>>, %arg7: memref<1x128xf32, #tpu.memory_space<vmem>>, %arg8: memref<384x128xf32, #tpu.memory_space<vmem>>, %arg9: memref<1x128xf32, #tpu.memory_space<vmem>>, %arg10: memref<32x32xf32, #tpu.memory_space<vmem>>, %arg11: memref<16x32xf32, #tpu.memory_space<vmem>>, %arg12: memref<16x128xf32, #tpu.memory_space<vmem>>) attributes {dimension_semantics = [#tpu.dimension_semantics<parallel>], iteration_bounds = array<i64: 1>, scalar_prefetch = 0 : i64, scratch_operands = 0 : i64, tpu.core_type = #tpu.core_type<tc>, window_params = [{transform_indices = @transform_0, window_bounds = array<i64: 32, 4>}, {pipeline_mode = #tpu.pipeline_mode<synchronous>, transform_indices = @transform_1, window_bounds = array<i64: 4, 32>}, {pipeline_mode = #tpu.pipeline_mode<synchronous>, transform_indices = @transform_2, window_bounds = array<i64: 1, 32>}, {pipeline_mode = #tpu.pipeline_mode<synchronous>, transform_indices = @transform_3, window_bounds = array<i64: 96, 128>}, {pipeline_mode = #tpu.pipeline_mode<synchronous>, transform_indices = @transform_4, window_bounds = array<i64: 1, 128>}, {pipeline_mode = #tpu.pipeline_mode<synchronous>, transform_indices = @transform_5, window_bounds = array<i64: 384, 128>}, {pipeline_mode = #tpu.pipeline_mode<synchronous>, transform_indices = @transform_6, window_bounds = array<i64: 1, 128>}, {pipeline_mode = #tpu.pipeline_mode<synchronous>, transform_indices = @transform_7, window_bounds = array<i64: 384, 128>}, {pipeline_mode = #tpu.pipeline_mode<synchronous>, transform_indices = @transform_8, window_bounds = array<i64: 1, 128>}, {pipeline_mode = #tpu.pipeline_mode<synchronous>, transform_indices = @transform_9, window_bounds = array<i64: 32, 32>}, {pipeline_mode = #tpu.pipeline_mode<synchronous>, transform_indices = @transform_10, window_bounds = array<i64: 16, 32>}, {transform_indices = @transform_11, window_bounds = array<i64: 16, 128>}]} {
    %c0 = arith.constant 0 : index
    %c0_0 = arith.constant 0 : index
    %0 = vector.load %arg1[%c0, %c0_0] : memref<32x4xf32, #tpu.memory_space<vmem>>, vector<32x4xf32>
    %c0_1 = arith.constant 0 : index
    %c0_2 = arith.constant 0 : index
    %1 = vector.load %arg2[%c0_1, %c0_2] : memref<4x32xf32, #tpu.memory_space<vmem>>, vector<4x32xf32>
    %cst = arith.constant dense<0.000000e+00> : vector<32x32xf32>
    %2 = tpu.matmul %0, %1, %cst {dimension_numbers = #tpu.dot_dimension_numbers<[1], [0], [0], [1], [0, 0, 1, 1], [], []>} : vector<32x4xf32>, vector<4x32xf32>, vector<32x32xf32> -> vector<32x32xf32>
    %c0_3 = arith.constant 0 : index
    %c0_4 = arith.constant 0 : index
    %3 = vector.load %arg3[%c0_3, %c0_4] : memref<1x32xf32, #tpu.memory_space<vmem>>, vector<1x32xf32>
    %4 = vector.broadcast %3 : vector<1x32xf32> to vector<32x32xf32>
    %5 = arith.addf %2, %4 : vector<32x32xf32>
    %cst_5 = arith.constant 5.000000e-01 : f32
    %6 = vector.broadcast %cst_5 : f32 to vector<32x32xf32>
    %7 = arith.mulf %6, %5 : vector<32x32xf32>
    %cst_6 = arith.constant 0.707106769 : f32
    %8 = vector.broadcast %cst_6 : f32 to vector<32x32xf32>
    %9 = arith.mulf %5, %8 : vector<32x32xf32>
    %cst_7 = arith.constant 0.000000e+00 : f32
    %10 = vector.broadcast %cst_7 : f32 to vector<32x32xf32>
    %11 = arith.cmpf oge, %9, %10 : vector<32x32xf32>
    %cst_8 = arith.constant 1.000000e+00 : f32
    %cst_9 = arith.constant -1.000000e+00 : f32
    %12 = vector.broadcast %cst_8 : f32 to vector<32x32xf32>
    %13 = vector.broadcast %cst_9 : f32 to vector<32x32xf32>
    %14 = arith.select %11, %12, %13 : vector<32x32xi1>, vector<32x32xf32>
    %15 = math.absf %9 : vector<32x32xf32>
    %cst_10 = arith.constant 0.327591091 : f32
    %16 = vector.broadcast %cst_10 : f32 to vector<32x32xf32>
    %17 = arith.mulf %16, %15 : vector<32x32xf32>
    %cst_11 = arith.constant 1.000000e+00 : f32
    %18 = vector.broadcast %cst_11 : f32 to vector<32x32xf32>
    %19 = arith.addf %18, %17 : vector<32x32xf32>
    %cst_12 = arith.constant 1.000000e+00 : f32
    %20 = vector.broadcast %cst_12 : f32 to vector<32x32xf32>
    %21 = arith.divf %20, %19 : vector<32x32xf32>
    %cst_13 = arith.constant 1.06140542 : f32
    %22 = vector.broadcast %cst_13 : f32 to vector<32x32xf32>
    %23 = arith.mulf %22, %21 : vector<32x32xf32>
    %cst_14 = arith.constant -1.45315206 : f32
    %24 = vector.broadcast %cst_14 : f32 to vector<32x32xf32>
    %25 = arith.addf %23, %24 : vector<32x32xf32>
    %26 = arith.mulf %25, %21 : vector<32x32xf32>
    %cst_15 = arith.constant 1.42141378 : f32
    %27 = vector.broadcast %cst_15 : f32 to vector<32x32xf32>
    %28 = arith.addf %26, %27 : vector<32x32xf32>
    %29 = arith.mulf %28, %21 : vector<32x32xf32>
    %cst_16 = arith.constant -0.284496725 : f32
    %30 = vector.broadcast %cst_16 : f32 to vector<32x32xf32>
    %31 = arith.addf %29, %30 : vector<32x32xf32>
    %32 = arith.mulf %31, %21 : vector<32x32xf32>
    %cst_17 = arith.constant 0.254829586 : f32
    %33 = vector.broadcast %cst_17 : f32 to vector<32x32xf32>
    %34 = arith.addf %32, %33 : vector<32x32xf32>
    %35 = arith.mulf %34, %21 : vector<32x32xf32>
    %cst_18 = arith.constant 0.000000e+00 : f32
    %36 = vector.broadcast %cst_18 : f32 to vector<32x32xf32>
    %37 = arith.subf %36, %15 : vector<32x32xf32>
    %38 = arith.mulf %37, %15 : vector<32x32xf32>
    %39 = math.exp %38 : vector<32x32xf32>
    %40 = arith.mulf %35, %39 : vector<32x32xf32>
    %cst_19 = arith.constant 1.000000e+00 : f32
    %41 = vector.broadcast %cst_19 : f32 to vector<32x32xf32>
    %42 = arith.subf %41, %40 : vector<32x32xf32>
    %43 = arith.mulf %14, %42 : vector<32x32xf32>
    %cst_20 = arith.constant 1.000000e+00 : f32
    %44 = vector.broadcast %cst_20 : f32 to vector<32x32xf32>
    %45 = arith.addf %44, %43 : vector<32x32xf32>
    %46 = arith.mulf %7, %45 : vector<32x32xf32>
    %c0_21 = arith.constant 0 : index
    %c0_22 = arith.constant 0 : index
    %47 = vector.load %arg4[%c0_21, %c0_22] : memref<96x128xf32, #tpu.memory_space<vmem>>, vector<96x128xf32>
    %c0_23 = arith.constant 0 : index
    %c0_24 = arith.constant 0 : index
    %48 = vector.load %arg5[%c0_23, %c0_24] : memref<1x128xf32, #tpu.memory_space<vmem>>, vector<1x128xf32>
    %cst_25 = arith.constant 0.000000e+00 : f32
    %49 = vector.broadcast %cst_25 : f32 to vector<2x32xf32>
    %50 = tpu.concatenate %46, %49 in 0 : vector<32x32xf32>, vector<2x32xf32> -> vector<34x32xf32>
    %51 = vector.extract_strided_slice %50 {offsets = [0, 0], sizes = [32, 32], strides = [1, 1]} : vector<34x32xf32> to vector<32x32xf32>
    %52 = vector.extract_strided_slice %50 {offsets = [1, 0], sizes = [32, 32], strides = [1, 1]} : vector<34x32xf32> to vector<32x32xf32>
    %53 = vector.extract_strided_slice %50 {offsets = [2, 0], sizes = [32, 32], strides = [1, 1]} : vector<34x32xf32> to vector<32x32xf32>
    %54 = tpu.concatenate %51, %52, %53 in 1 : vector<32x32xf32>, vector<32x32xf32>, vector<32x32xf32> -> vector<32x96xf32>
    %cst_26 = arith.constant dense<0.000000e+00> : vector<32x128xf32>
    %55 = tpu.matmul %54, %47, %cst_26 {dimension_numbers = #tpu.dot_dimension_numbers<[1], [0], [0], [1], [0, 0, 1, 1], [], []>} : vector<32x96xf32>, vector<96x128xf32>, vector<32x128xf32> -> vector<32x128xf32>
    %56 = vector.broadcast %48 : vector<1x128xf32> to vector<32x128xf32>
    %57 = arith.addf %55, %56 : vector<32x128xf32>
    %cst_27 = arith.constant 5.000000e-01 : f32
    %58 = vector.broadcast %cst_27 : f32 to vector<32x128xf32>
    %59 = arith.mulf %58, %57 : vector<32x128xf32>
    %cst_28 = arith.constant 0.707106769 : f32
    %60 = vector.broadcast %cst_28 : f32 to vector<32x128xf32>
    %61 = arith.mulf %57, %60 : vector<32x128xf32>
    %cst_29 = arith.constant 0.000000e+00 : f32
    %62 = vector.broadcast %cst_29 : f32 to vector<32x128xf32>
    %63 = arith.cmpf oge, %61, %62 : vector<32x128xf32>
    %cst_30 = arith.constant 1.000000e+00 : f32
    %cst_31 = arith.constant -1.000000e+00 : f32
    %64 = vector.broadcast %cst_30 : f32 to vector<32x128xf32>
    %65 = vector.broadcast %cst_31 : f32 to vector<32x128xf32>
    %66 = arith.select %63, %64, %65 : vector<32x128xi1>, vector<32x128xf32>
    %67 = math.absf %61 : vector<32x128xf32>
    %cst_32 = arith.constant 0.327591091 : f32
    %68 = vector.broadcast %cst_32 : f32 to vector<32x128xf32>
    %69 = arith.mulf %68, %67 : vector<32x128xf32>
    %cst_33 = arith.constant 1.000000e+00 : f32
    %70 = vector.broadcast %cst_33 : f32 to vector<32x128xf32>
    %71 = arith.addf %70, %69 : vector<32x128xf32>
    %cst_34 = arith.constant 1.000000e+00 : f32
    %72 = vector.broadcast %cst_34 : f32 to vector<32x128xf32>
    %73 = arith.divf %72, %71 : vector<32x128xf32>
    %cst_35 = arith.constant 1.06140542 : f32
    %74 = vector.broadcast %cst_35 : f32 to vector<32x128xf32>
    %75 = arith.mulf %74, %73 : vector<32x128xf32>
    %cst_36 = arith.constant -1.45315206 : f32
    %76 = vector.broadcast %cst_36 : f32 to vector<32x128xf32>
    %77 = arith.addf %75, %76 : vector<32x128xf32>
    %78 = arith.mulf %77, %73 : vector<32x128xf32>
    %cst_37 = arith.constant 1.42141378 : f32
    %79 = vector.broadcast %cst_37 : f32 to vector<32x128xf32>
    %80 = arith.addf %78, %79 : vector<32x128xf32>
    %81 = arith.mulf %80, %73 : vector<32x128xf32>
    %cst_38 = arith.constant -0.284496725 : f32
    %82 = vector.broadcast %cst_38 : f32 to vector<32x128xf32>
    %83 = arith.addf %81, %82 : vector<32x128xf32>
    %84 = arith.mulf %83, %73 : vector<32x128xf32>
    %cst_39 = arith.constant 0.254829586 : f32
    %85 = vector.broadcast %cst_39 : f32 to vector<32x128xf32>
    %86 = arith.addf %84, %85 : vector<32x128xf32>
    %87 = arith.mulf %86, %73 : vector<32x128xf32>
    %cst_40 = arith.constant 0.000000e+00 : f32
    %88 = vector.broadcast %cst_40 : f32 to vector<32x128xf32>
    %89 = arith.subf %88, %67 : vector<32x128xf32>
    %90 = arith.mulf %89, %67 : vector<32x128xf32>
    %91 = math.exp %90 : vector<32x128xf32>
    %92 = arith.mulf %87, %91 : vector<32x128xf32>
    %cst_41 = arith.constant 1.000000e+00 : f32
    %93 = vector.broadcast %cst_41 : f32 to vector<32x128xf32>
    %94 = arith.subf %93, %92 : vector<32x128xf32>
    %95 = arith.mulf %66, %94 : vector<32x128xf32>
    %cst_42 = arith.constant 1.000000e+00 : f32
    %96 = vector.broadcast %cst_42 : f32 to vector<32x128xf32>
    %97 = arith.addf %96, %95 : vector<32x128xf32>
    %98 = arith.mulf %59, %97 : vector<32x128xf32>
    %c0_43 = arith.constant 0 : index
    %c0_44 = arith.constant 0 : index
    %99 = vector.load %arg6[%c0_43, %c0_44] : memref<384x128xf32, #tpu.memory_space<vmem>>, vector<384x128xf32>
    %c0_45 = arith.constant 0 : index
    %c0_46 = arith.constant 0 : index
    %100 = vector.load %arg7[%c0_45, %c0_46] : memref<1x128xf32, #tpu.memory_space<vmem>>, vector<1x128xf32>
    %cst_47 = arith.constant 0.000000e+00 : f32
    %101 = vector.broadcast %cst_47 : f32 to vector<2x128xf32>
    %102 = tpu.concatenate %98, %101 in 0 : vector<32x128xf32>, vector<2x128xf32> -> vector<34x128xf32>
    %103 = vector.extract_strided_slice %102 {offsets = [0, 0], sizes = [32, 128], strides = [1, 1]} : vector<34x128xf32> to vector<32x128xf32>
    %104 = vector.extract_strided_slice %102 {offsets = [1, 0], sizes = [32, 128], strides = [1, 1]} : vector<34x128xf32> to vector<32x128xf32>
    %105 = vector.extract_strided_slice %102 {offsets = [2, 0], sizes = [32, 128], strides = [1, 1]} : vector<34x128xf32> to vector<32x128xf32>
    %106 = tpu.concatenate %103, %104, %105 in 1 : vector<32x128xf32>, vector<32x128xf32>, vector<32x128xf32> -> vector<32x384xf32>
    %cst_48 = arith.constant dense<0.000000e+00> : vector<32x128xf32>
    %107 = tpu.matmul %106, %99, %cst_48 {dimension_numbers = #tpu.dot_dimension_numbers<[1], [0], [0], [1], [0, 0, 1, 1], [], []>} : vector<32x384xf32>, vector<384x128xf32>, vector<32x128xf32> -> vector<32x128xf32>
    %108 = vector.broadcast %100 : vector<1x128xf32> to vector<32x128xf32>
    %109 = arith.addf %107, %108 : vector<32x128xf32>
    %c0_49 = arith.constant 0 : index
    %c0_50 = arith.constant 0 : index
    %110 = vector.load %arg10[%c0_49, %c0_50] : memref<32x32xf32, #tpu.memory_space<vmem>>, vector<32x32xf32>
    %cst_51 = arith.constant 0.000000e+00 : f32
    %111 = vector.broadcast %cst_51 : f32 to vector<2x128xf32>
    %112 = tpu.concatenate %109, %111 in 0 : vector<32x128xf32>, vector<2x128xf32> -> vector<34x128xf32>
    %113 = vector.extract_strided_slice %112 {offsets = [0, 0], sizes = [32, 128], strides = [1, 1]} : vector<34x128xf32> to vector<32x128xf32>
    %114 = vector.extract_strided_slice %112 {offsets = [1, 0], sizes = [32, 128], strides = [1, 1]} : vector<34x128xf32> to vector<32x128xf32>
    %115 = arith.maximumf %113, %114 : vector<32x128xf32>
    %116 = vector.extract_strided_slice %112 {offsets = [2, 0], sizes = [32, 128], strides = [1, 1]} : vector<34x128xf32> to vector<32x128xf32>
    %117 = arith.maximumf %115, %116 : vector<32x128xf32>
    %cst_52 = arith.constant dense<0.000000e+00> : vector<32x128xf32>
    %118 = tpu.matmul %110, %117, %cst_52 {dimension_numbers = #tpu.dot_dimension_numbers<[1], [0], [0], [1], [0, 0, 1, 1], [], []>} : vector<32x32xf32>, vector<32x128xf32>, vector<32x128xf32> -> vector<32x128xf32>
    %cst_53 = arith.constant 5.000000e-01 : f32
    %119 = vector.broadcast %cst_53 : f32 to vector<32x128xf32>
    %120 = arith.mulf %119, %118 : vector<32x128xf32>
    %cst_54 = arith.constant 0.707106769 : f32
    %121 = vector.broadcast %cst_54 : f32 to vector<32x128xf32>
    %122 = arith.mulf %118, %121 : vector<32x128xf32>
    %cst_55 = arith.constant 0.000000e+00 : f32
    %123 = vector.broadcast %cst_55 : f32 to vector<32x128xf32>
    %124 = arith.cmpf oge, %122, %123 : vector<32x128xf32>
    %cst_56 = arith.constant 1.000000e+00 : f32
    %cst_57 = arith.constant -1.000000e+00 : f32
    %125 = vector.broadcast %cst_56 : f32 to vector<32x128xf32>
    %126 = vector.broadcast %cst_57 : f32 to vector<32x128xf32>
    %127 = arith.select %124, %125, %126 : vector<32x128xi1>, vector<32x128xf32>
    %128 = math.absf %122 : vector<32x128xf32>
    %cst_58 = arith.constant 0.327591091 : f32
    %129 = vector.broadcast %cst_58 : f32 to vector<32x128xf32>
    %130 = arith.mulf %129, %128 : vector<32x128xf32>
    %cst_59 = arith.constant 1.000000e+00 : f32
    %131 = vector.broadcast %cst_59 : f32 to vector<32x128xf32>
    %132 = arith.addf %131, %130 : vector<32x128xf32>
    %cst_60 = arith.constant 1.000000e+00 : f32
    %133 = vector.broadcast %cst_60 : f32 to vector<32x128xf32>
    %134 = arith.divf %133, %132 : vector<32x128xf32>
    %cst_61 = arith.constant 1.06140542 : f32
    %135 = vector.broadcast %cst_61 : f32 to vector<32x128xf32>
    %136 = arith.mulf %135, %134 : vector<32x128xf32>
    %cst_62 = arith.constant -1.45315206 : f32
    %137 = vector.broadcast %cst_62 : f32 to vector<32x128xf32>
    %138 = arith.addf %136, %137 : vector<32x128xf32>
    %139 = arith.mulf %138, %134 : vector<32x128xf32>
    %cst_63 = arith.constant 1.42141378 : f32
    %140 = vector.broadcast %cst_63 : f32 to vector<32x128xf32>
    %141 = arith.addf %139, %140 : vector<32x128xf32>
    %142 = arith.mulf %141, %134 : vector<32x128xf32>
    %cst_64 = arith.constant -0.284496725 : f32
    %143 = vector.broadcast %cst_64 : f32 to vector<32x128xf32>
    %144 = arith.addf %142, %143 : vector<32x128xf32>
    %145 = arith.mulf %144, %134 : vector<32x128xf32>
    %cst_65 = arith.constant 0.254829586 : f32
    %146 = vector.broadcast %cst_65 : f32 to vector<32x128xf32>
    %147 = arith.addf %145, %146 : vector<32x128xf32>
    %148 = arith.mulf %147, %134 : vector<32x128xf32>
    %cst_66 = arith.constant 0.000000e+00 : f32
    %149 = vector.broadcast %cst_66 : f32 to vector<32x128xf32>
    %150 = arith.subf %149, %128 : vector<32x128xf32>
    %151 = arith.mulf %150, %128 : vector<32x128xf32>
    %152 = math.exp %151 : vector<32x128xf32>
    %153 = arith.mulf %148, %152 : vector<32x128xf32>
    %cst_67 = arith.constant 1.000000e+00 : f32
    %154 = vector.broadcast %cst_67 : f32 to vector<32x128xf32>
    %155 = arith.subf %154, %153 : vector<32x128xf32>
    %156 = arith.mulf %127, %155 : vector<32x128xf32>
    %cst_68 = arith.constant 1.000000e+00 : f32
    %157 = vector.broadcast %cst_68 : f32 to vector<32x128xf32>
    %158 = arith.addf %157, %156 : vector<32x128xf32>
    %159 = arith.mulf %120, %158 : vector<32x128xf32>
    %c0_69 = arith.constant 0 : index
    %c0_70 = arith.constant 0 : index
    %160 = vector.load %arg8[%c0_69, %c0_70] : memref<384x128xf32, #tpu.memory_space<vmem>>, vector<384x128xf32>
    %c0_71 = arith.constant 0 : index
    %c0_72 = arith.constant 0 : index
    %161 = vector.load %arg9[%c0_71, %c0_72] : memref<1x128xf32, #tpu.memory_space<vmem>>, vector<1x128xf32>
    %cst_73 = arith.constant 0.000000e+00 : f32
    %162 = vector.broadcast %cst_73 : f32 to vector<2x128xf32>
    %163 = tpu.concatenate %159, %162 in 0 : vector<32x128xf32>, vector<2x128xf32> -> vector<34x128xf32>
    %164 = vector.extract_strided_slice %163 {offsets = [0, 0], sizes = [32, 128], strides = [1, 1]} : vector<34x128xf32> to vector<32x128xf32>
    %165 = vector.extract_strided_slice %163 {offsets = [1, 0], sizes = [32, 128], strides = [1, 1]} : vector<34x128xf32> to vector<32x128xf32>
    %166 = vector.extract_strided_slice %163 {offsets = [2, 0], sizes = [32, 128], strides = [1, 1]} : vector<34x128xf32> to vector<32x128xf32>
    %167 = tpu.concatenate %164, %165, %166 in 1 : vector<32x128xf32>, vector<32x128xf32>, vector<32x128xf32> -> vector<32x384xf32>
    %cst_74 = arith.constant dense<0.000000e+00> : vector<32x128xf32>
    %168 = tpu.matmul %167, %160, %cst_74 {dimension_numbers = #tpu.dot_dimension_numbers<[1], [0], [0], [1], [0, 0, 1, 1], [], []>} : vector<32x384xf32>, vector<384x128xf32>, vector<32x128xf32> -> vector<32x128xf32>
    %169 = vector.broadcast %161 : vector<1x128xf32> to vector<32x128xf32>
    %170 = arith.addf %168, %169 : vector<32x128xf32>
    %c0_75 = arith.constant 0 : index
    %c0_76 = arith.constant 0 : index
    %171 = vector.load %arg11[%c0_75, %c0_76] : memref<16x32xf32, #tpu.memory_space<vmem>>, vector<16x32xf32>
    %cst_77 = arith.constant 0.000000e+00 : f32
    %172 = vector.broadcast %cst_77 : f32 to vector<1x128xf32>
    %173 = tpu.concatenate %170, %172 in 0 : vector<32x128xf32>, vector<1x128xf32> -> vector<33x128xf32>
    %174 = vector.extract_strided_slice %173 {offsets = [0, 0], sizes = [32, 128], strides = [1, 1]} : vector<33x128xf32> to vector<32x128xf32>
    %175 = vector.extract_strided_slice %173 {offsets = [1, 0], sizes = [32, 128], strides = [1, 1]} : vector<33x128xf32> to vector<32x128xf32>
    %176 = arith.maximumf %174, %175 : vector<32x128xf32>
    %cst_78 = arith.constant dense<0.000000e+00> : vector<16x128xf32>
    %177 = tpu.matmul %171, %176, %cst_78 {dimension_numbers = #tpu.dot_dimension_numbers<[1], [0], [0], [1], [0, 0, 1, 1], [], []>} : vector<16x32xf32>, vector<32x128xf32>, vector<16x128xf32> -> vector<16x128xf32>
    %cst_79 = arith.constant 5.000000e-01 : f32
    %178 = vector.broadcast %cst_79 : f32 to vector<16x128xf32>
    %179 = arith.mulf %178, %177 : vector<16x128xf32>
    %cst_80 = arith.constant 0.707106769 : f32
    %180 = vector.broadcast %cst_80 : f32 to vector<16x128xf32>
    %181 = arith.mulf %177, %180 : vector<16x128xf32>
    %cst_81 = arith.constant 0.000000e+00 : f32
    %182 = vector.broadcast %cst_81 : f32 to vector<16x128xf32>
    %183 = arith.cmpf oge, %181, %182 : vector<16x128xf32>
    %cst_82 = arith.constant 1.000000e+00 : f32
    %cst_83 = arith.constant -1.000000e+00 : f32
    %184 = vector.broadcast %cst_82 : f32 to vector<16x128xf32>
    %185 = vector.broadcast %cst_83 : f32 to vector<16x128xf32>
    %186 = arith.select %183, %184, %185 : vector<16x128xi1>, vector<16x128xf32>
    %187 = math.absf %181 : vector<16x128xf32>
    %cst_84 = arith.constant 0.327591091 : f32
    %188 = vector.broadcast %cst_84 : f32 to vector<16x128xf32>
    %189 = arith.mulf %188, %187 : vector<16x128xf32>
    %cst_85 = arith.constant 1.000000e+00 : f32
    %190 = vector.broadcast %cst_85 : f32 to vector<16x128xf32>
    %191 = arith.addf %190, %189 : vector<16x128xf32>
    %cst_86 = arith.constant 1.000000e+00 : f32
    %192 = vector.broadcast %cst_86 : f32 to vector<16x128xf32>
    %193 = arith.divf %192, %191 : vector<16x128xf32>
    %cst_87 = arith.constant 1.06140542 : f32
    %194 = vector.broadcast %cst_87 : f32 to vector<16x128xf32>
    %195 = arith.mulf %194, %193 : vector<16x128xf32>
    %cst_88 = arith.constant -1.45315206 : f32
    %196 = vector.broadcast %cst_88 : f32 to vector<16x128xf32>
    %197 = arith.addf %195, %196 : vector<16x128xf32>
    %198 = arith.mulf %197, %193 : vector<16x128xf32>
    %cst_89 = arith.constant 1.42141378 : f32
    %199 = vector.broadcast %cst_89 : f32 to vector<16x128xf32>
    %200 = arith.addf %198, %199 : vector<16x128xf32>
    %201 = arith.mulf %200, %193 : vector<16x128xf32>
    %cst_90 = arith.constant -0.284496725 : f32
    %202 = vector.broadcast %cst_90 : f32 to vector<16x128xf32>
    %203 = arith.addf %201, %202 : vector<16x128xf32>
    %204 = arith.mulf %203, %193 : vector<16x128xf32>
    %cst_91 = arith.constant 0.254829586 : f32
    %205 = vector.broadcast %cst_91 : f32 to vector<16x128xf32>
    %206 = arith.addf %204, %205 : vector<16x128xf32>
    %207 = arith.mulf %206, %193 : vector<16x128xf32>
    %cst_92 = arith.constant 0.000000e+00 : f32
    %208 = vector.broadcast %cst_92 : f32 to vector<16x128xf32>
    %209 = arith.subf %208, %187 : vector<16x128xf32>
    %210 = arith.mulf %209, %187 : vector<16x128xf32>
    %211 = math.exp %210 : vector<16x128xf32>
    %212 = arith.mulf %207, %211 : vector<16x128xf32>
    %cst_93 = arith.constant 1.000000e+00 : f32
    %213 = vector.broadcast %cst_93 : f32 to vector<16x128xf32>
    %214 = arith.subf %213, %212 : vector<16x128xf32>
    %215 = arith.mulf %186, %214 : vector<16x128xf32>
    %cst_94 = arith.constant 1.000000e+00 : f32
    %216 = vector.broadcast %cst_94 : f32 to vector<16x128xf32>
    %217 = arith.addf %216, %215 : vector<16x128xf32>
    %218 = arith.mulf %179, %217 : vector<16x128xf32>
    %c0_95 = arith.constant 0 : index
    %c0_96 = arith.constant 0 : index
    %219 = vector.load %arg12[%c0_95, %c0_96] : memref<16x128xf32, #tpu.memory_space<vmem>>, vector<16x128xf32>
    tpu.vector_store %arg12[%c0_95, %c0_96], %218 {strides = array<i32>} : memref<16x128xf32, #tpu.memory_space<vmem>>, vector<16x128xf32>,
    return
  }
  func.func @transform_0(%arg0: i32) -> (i32, i32) {
    %c0_i32 = arith.constant 0 : i32
    %c0_i32_0 = arith.constant 0 : i32
    return %arg0, %c0_i32 : i32, i32
  }
  func.func @transform_1(%arg0: i32) -> (i32, i32) {
    %c0_i32 = arith.constant 0 : i32
    %c0_i32_0 = arith.constant 0 : i32
    %c0_i32_1 = arith.constant 0 : i32
    return %c0_i32, %c0_i32_0 : i32, i32
  }
  func.func @transform_2(%arg0: i32) -> (i32, i32) {
    %c0_i32 = arith.constant 0 : i32
    %c0_i32_0 = arith.constant 0 : i32
    %c0_i32_1 = arith.constant 0 : i32
    return %c0_i32, %c0_i32_0 : i32, i32
  }
  func.func @transform_3(%arg0: i32) -> (i32, i32) {
    %c0_i32 = arith.constant 0 : i32
    %c0_i32_0 = arith.constant 0 : i32
    %c0_i32_1 = arith.constant 0 : i32
    return %c0_i32, %c0_i32_0 : i32, i32
  }
  func.func @transform_4(%arg0: i32) -> (i32, i32) {
    %c0_i32 = arith.constant 0 : i32
    %c0_i32_0 = arith.constant 0 : i32
    %c0_i32_1 = arith.constant 0 : i32
    return %c0_i32, %c0_i32_0 : i32, i32
  }
  func.func @transform_5(%arg0: i32) -> (i32, i32) {
    %c0_i32 = arith.constant 0 : i32
    %c0_i32_0 = arith.constant 0 : i32
    %c0_i32_1 = arith.constant 0 : i32
    return %c0_i32, %c0_i32_0 : i32, i32
  }
  func.func @transform_6(%arg0: i32) -> (i32, i32) {
    %c0_i32 = arith.constant 0 : i32
    %c0_i32_0 = arith.constant 0 : i32
    %c0_i32_1 = arith.constant 0 : i32
    return %c0_i32, %c0_i32_0 : i32, i32
  }
  func.func @transform_7(%arg0: i32) -> (i32, i32) {
    %c0_i32 = arith.constant 0 : i32
    %c0_i32_0 = arith.constant 0 : i32
    %c0_i32_1 = arith.constant 0 : i32
    return %c0_i32, %c0_i32_0 : i32, i32
  }
  func.func @transform_8(%arg0: i32) -> (i32, i32) {
    %c0_i32 = arith.constant 0 : i32
    %c0_i32_0 = arith.constant 0 : i32
    %c0_i32_1 = arith.constant 0 : i32
    return %c0_i32, %c0_i32_0 : i32, i32
  }
  func.func @transform_9(%arg0: i32) -> (i32, i32) {
    %c0_i32 = arith.constant 0 : i32
    %c0_i32_0 = arith.constant 0 : i32
    %c0_i32_1 = arith.constant 0 : i32
    return %c0_i32, %c0_i32_0 : i32, i32
  }
  func.func @transform_10(%arg0: i32) -> (i32, i32) {
    %c0_i32 = arith.constant 0 : i32
    %c0_i32_0 = arith.constant 0 : i32
    %c0_i32_1 = arith.constant 0 : i32
    return %c0_i32, %c0_i32_0 : i32, i32
  }
  func.func @transform_11(%arg0: i32) -> (i32, i32) {
    %c0_i32 = arith.constant 0 : i32
    %c0_i32_0 = arith.constant 0 : i32
    return %arg0, %c0_i32 : i32, i32
  }
}

</mosaic_0001>

<llo_original>
// kernel: tpu_custom_call.1
$region0: #{tpu_custom_call.1}
  #allocation0 [shape = 'u32[]', space=smem, size = 0x4, offset = 0x4, fixed_abs, tag = 'smem constant byte address 0x4 - core index']
  #allocation1 [shape = 'u32[144,128]{1,0:T(1,128)}', space=vmem, size = 0x12000, scoped, tag = 'internal scratch']
  %s0 = inlined_call_operand.vmem [shape: f32[32,4], index: 0, kind: input, shape index: {}]
  %s1 = inlined_call_operand.vmem [shape: f32[4,32], index: 1, kind: input, shape index: {}]
  %s2 = inlined_call_operand.vmem [shape: f32[1,32], index: 2, kind: input, shape index: {}]
  %s3 = inlined_call_operand.hbm [shape: f32[96,128], index: 3, kind: input, shape index: {}]
  %s4 = inlined_call_operand.vmem [shape: f32[1,128], index: 4, kind: input, shape index: {}]
  %s5 = inlined_call_operand.hbm [shape: f32[384,128], index: 5, kind: input, shape index: {}]
  %s6 = inlined_call_operand.vmem [shape: f32[1,128], index: 6, kind: input, shape index: {}]
  %s7 = inlined_call_operand.hbm [shape: f32[384,128], index: 7, kind: input, shape index: {}]
  %s8 = inlined_call_operand.vmem [shape: f32[1,128], index: 8, kind: input, shape index: {}]
  %s9 = inlined_call_operand.vmem [shape: f32[32,32], index: 9, kind: input, shape index: {}]
  %s10 = inlined_call_operand.vmem [shape: f32[16,32], index: 10, kind: input, shape index: {}]
  %s11 = inlined_call_operand.hbm [shape: f32[16,128], index: 11, kind: output, shape index: {}]
  %s12 = sld [smem:[#allocation0]]
  $region66: #{tpu_custom_call.1} parent=0
    _
  %s14 = ssub.s32 1, %s12
  %s15 = scalar_select 0, %s14, %s12
  $region1: #{tpu_custom_call.1} parent=0
    #allocation2 [shape = 'u8[49152]{0}', space=vmem, size = 0xc000, scoped, tag = 'input window, operand 3, single buffered']
    #allocation3 [shape = 's32[1]{0}', space=sflag, size = 0x4, scoped, tag = 'scoped memory for tpu_custom_call.1']
    #allocation4 [shape = 's32[1]{0}', space=sflag, size = 0x4, scoped, tag = 'scoped memory for tpu_custom_call.1']
    #allocation5 [shape = 'u8[196608]{0}', space=vmem, size = 0x30000, scoped, tag = 'input window, operand 5, single buffered']
    #allocation6 [shape = 's32[1]{0}', space=sflag, size = 0x4, scoped, tag = 'scoped memory for tpu_custom_call.1']
    #allocation7 [shape = 'u8[196608]{0}', space=vmem, size = 0x30000, scoped, tag = 'input window, operand 7, single buffered']
    #allocation8 [shape = 'u8[8192]{0}', space=vmem, size = 0x2000, scoped, tag = 'output window, operand 0, single buffered']
    %16 = vsyncpa [#allocation3], 0
    %17 = vsyncpa [#allocation6], 0
    %18 = vsyncpa [#allocation4], 0
    // Predicated region
    $region2: #{tpu_custom_call.1} parent=1 // pred_check
      _
    $region3: #{tpu_custom_call.1} parent=1 // pred_check_branch
      %20 = sbr.rel (0) target = $region5
    $region4: #{tpu_custom_call.1} parent=1 // pred_region
      _
    $region5: #{tpu_custom_call.1} parent=1 // pred_fallthru
      _
    // Predicated region
    $region6: #{tpu_custom_call.1} parent=1 // pred_check
      _
    $region7: #{tpu_custom_call.1} parent=1 // pred_check_branch
      %22 = sbr.rel (0) target = $region9
    $region8: #{tpu_custom_call.1} parent=1 // pred_region
      _
    $region9: #{tpu_custom_call.1} parent=1 // pred_fallthru
      _
    // Predicated region
    $region10: #{tpu_custom_call.1} parent=1 // pred_check
      _
    $region11: #{tpu_custom_call.1} parent=1 // pred_check_branch
      %24 = sbr.rel (0) target = $region13
    $region12: #{tpu_custom_call.1} parent=1 // pred_region
      _
    $region13: #{tpu_custom_call.1} parent=1 // pred_fallthru
      _
    // Predicated region
    $region14: #{tpu_custom_call.1} parent=1 // pred_check
      _
    $region15: #{tpu_custom_call.1} parent=1 // pred_check_branch
      %26 = sbr.rel (0) target = $region17
    $region16: #{tpu_custom_call.1} parent=1 // pred_region
      %s28 = ssub.s32 1536, 1536
      %29 = vsyncadd [#allocation3], %s28
      %s30 = sshll.u32 [#allocation2], 4
      %s31 = int_to_ptr.vmem [resolvable:$true] %s30
      %36 = dma.hbm_to_vmem [thread:$0]  %s3, 1536, %s31, [#allocation3], 128, 128, 8
    $region17: #{tpu_custom_call.1} parent=1 // pred_fallthru
      _
    // Predicated region
    $region18: #{tpu_custom_call.1} parent=1 // pred_check
      _
    $region19: #{tpu_custom_call.1} parent=1 // pred_check_branch
      %38 = sbr.rel (0) target = $region21
    $region20: #{tpu_custom_call.1} parent=1 // pred_region
      _
    $region21: #{tpu_custom_call.1} parent=1 // pred_fallthru
      _
    // Predicated region
    $region22: #{tpu_custom_call.1} parent=1 // pred_check
      _
    $region23: #{tpu_custom_call.1} parent=1 // pred_check_branch
      %40 = sbr.rel (0) target = $region25
    $region24: #{tpu_custom_call.1} parent=1 // pred_region
      %s42 = ssub.s32 6144, 6144
      %43 = vsyncadd [#allocation6], %s42
      %s44 = sshll.u32 [#allocation5], 4
      %s45 = int_to_ptr.vmem [resolvable:$true] %s44
      %50 = dma.hbm_to_vmem [thread:$0]  %s5, 6144, %s45, [#allocation6], 128, 128, 8
    $region25: #{tpu_custom_call.1} parent=1 // pred_fallthru
      _
    // Predicated region
    $region26: #{tpu_custom_call.1} parent=1 // pred_check
      _
    $region27: #{tpu_custom_call.1} parent=1 // pred_check_branch
      %52 = sbr.rel (0) target = $region29
    $region28: #{tpu_custom_call.1} parent=1 // pred_region
      _
    $region29: #{tpu_custom_call.1} parent=1 // pred_fallthru
      _
    // Predicated region
    $region30: #{tpu_custom_call.1} parent=1 // pred_check
      _
    $region31: #{tpu_custom_call.1} parent=1 // pred_check_branch
      %54 = sbr.rel (0) target = $region33
    $region32: #{tpu_custom_call.1} parent=1 // pred_region
      %s56 = ssub.s32 6144, 6144
      %57 = vsyncadd [#allocation6], %s56
      %s58 = sshll.u32 [#allocation7], 4
      %s59 = int_to_ptr.vmem [resolvable:$true] %s58
      %64 = dma.hbm_to_vmem [thread:$0]  %s7, 6144, %s59, [#allocation6], 128, 128, 8
    $region33: #{tpu_custom_call.1} parent=1 // pred_fallthru
      _
    // Predicated region
    $region34: #{tpu_custom_call.1} parent=1 // pred_check
      _
    $region35: #{tpu_custom_call.1} parent=1 // pred_check_branch
      %66 = sbr.rel (0) target = $region37
    $region36: #{tpu_custom_call.1} parent=1 // pred_region
      _
    $region37: #{tpu_custom_call.1} parent=1 // pred_fallthru
      _
    // Predicated region
    $region38: #{tpu_custom_call.1} parent=1 // pred_check
      _
    $region39: #{tpu_custom_call.1} parent=1 // pred_check_branch
      %68 = sbr.rel (0) target = $region41
    $region40: #{tpu_custom_call.1} parent=1 // pred_region
      _
    $region41: #{tpu_custom_call.1} parent=1 // pred_fallthru
      _
    // Predicated region
    $region42: #{tpu_custom_call.1} parent=1 // pred_check
      _
    $region43: #{tpu_custom_call.1} parent=1 // pred_check_branch
      %70 = sbr.rel (0) target = $region45
    $region44: #{tpu_custom_call.1} parent=1 // pred_region
      _
    $region45: #{tpu_custom_call.1} parent=1 // pred_fallthru
      _
    // Predicated region
    $region46: #{tpu_custom_call.1} parent=1 // pred_check
      _
    $region47: #{tpu_custom_call.1} parent=1 // pred_check_branch
      %72 = sbr.rel (0) target = $region49
    $region48: #{tpu_custom_call.1} parent=1 // pred_region
      %73 = dma.done [#allocation3], 1536
    $region49: #{tpu_custom_call.1} parent=1 // pred_fallthru
      _
    // Predicated region
    $region50: #{tpu_custom_call.1} parent=1 // pred_check
      _
    $region51: #{tpu_custom_call.1} parent=1 // pred_check_branch
      %75 = sbr.rel (0) target = $region53
    $region52: #{tpu_custom_call.1} parent=1 // pred_region
      %76 = dma.done [#allocation6], 6144
    $region53: #{tpu_custom_call.1} parent=1 // pred_fallthru
      _
    // Predicated region
    $region54: #{tpu_custom_call.1} parent=1 // pred_check
      _
    $region55: #{tpu_custom_call.1} parent=1 // pred_check_branch
      %78 = sbr.rel (0) target = $region57
    $region56: #{tpu_custom_call.1} parent=1 // pred_region
      %79 = dma.done [#allocation6], 6144
    $region57: #{tpu_custom_call.1} parent=1 // pred_fallthru
      _
    %v80 = vld [vmem:[%s0] sm:$0xff]
    %v81 = vld [vmem:[%s0 + $0x8] sm:$0xff]
    %v82 = vld [vmem:[%s0 + $0x10] sm:$0xff]
    %v83 = vld [vmem:[%s0 + $0x18] sm:$0xff]
    %v84 = vld [vmem:[%s1] sm:$0xf]
    %v85 = vld [vmem:[%s2] sm:$0x1]
    %v87 = vlaneseq
    %v88 = vshrl.u32 %v87, 7
    %v89 = vsub.s32 0, %v88
    %v90 = vrot.slane %v85, %v89
    %vm92 = vcmask 31744
    %v94 = vsel %vm92, %v80, 0
    %v97 = vsel %vm92, %v81, 0
    %v100 = vsel %vm92, %v82, 0
    %v103 = vsel %vm92, %v83, 0
    %vm105 = vcmask 1043456
    %v107 = vsel %vm105, %v84, 0
    %109 = vmatprep.subr.mxu0 0.0
    %110 = vmatpush1.msra.mxu0 %v107
    %111 = vmatprep.subr.mxu0 0.0
    %112 = vmatpush1.msra.mxu0 0.0
    %113 = vmatprep.subr.mxu0 0.0
    %114 = vmatpush1.msra.mxu0 0.0
    %115 = vmatprep.subr.mxu0 0.0
    %116 = vmatpush1.msra.mxu0 0.0
    %117 = vmatprep.subr.mxu0 0.0
    %118 = vmatpush1.msra.mxu0 0.0
    %119 = vmatprep.subr.mxu0 0.0
    %120 = vmatpush1.msra.mxu0 0.0
    %121 = vmatprep.subr.mxu0 0.0
    %122 = vmatpush1.msra.mxu0 0.0
    %123 = vmatprep.subr.mxu0 0.0
    %124 = vmatpush1.msra.mxu0 0.0
    %125 = vmatprep.subr.mxu0 0.0
    %126 = vmatpush1.msra.mxu0 0.0
    %127 = vmatprep.subr.mxu0 0.0
    %128 = vmatpush1.msra.mxu0 0.0
    %129 = vmatprep.subr.mxu0 0.0
    %130 = vmatpush1.msra.mxu0 0.0
    %131 = vmatprep.subr.mxu0 0.0
    %132 = vmatpush1.msra.mxu0 0.0
    %133 = vmatprep.subr.mxu0 0.0
    %134 = vmatpush1.msra.mxu0 0.0
    %135 = vmatprep.subr.mxu0 0.0
    %136 = vmatpush1.msra.mxu0 0.0
    %137 = vmatprep.subr.mxu0 0.0
    %138 = vmatpush1.msra.mxu0 0.0
    %139 = vmatprep.subr.mxu0 0.0
    %140 = vmatpush1.msra.mxu0 0.0
    %141 = vmatprep.subr.mxu0 0.0
    %142 = vmatpush1.msra.mxu0 0.0
    %143 = vmatprep.subr.mxu0 0.0
    %144 = vmatpush1.msra.mxu0 0.0
    %145 = vmatprep.subr.mxu0 0.0
    %146 = vmatpush1.msra.mxu0 0.0
    %147 = vmatprep.subr.mxu0 0.0
    %148 = vmatpush1.msra.mxu0 0.0
    %149 = vmatprep.subr.mxu0 0.0
    %150 = vmatpush1.msra.mxu0 0.0
    %151 = vmatprep.subr.mxu0 0.0
    %152 = vmatpush1.msra.mxu0 0.0
    %153 = vmatprep.subr.mxu0 0.0
    %154 = vmatpush1.msra.mxu0 0.0
    %155 = vmatprep.subr.mxu0 0.0
    %156 = vmatpush1.msra.mxu0 0.0
    %157 = vmatprep.subr.mxu0 0.0
    %158 = vmatpush1.msra.mxu0 0.0
    %159 = vmatprep.subr.mxu0 0.0
    %160 = vmatpush1.msra.mxu0 0.0
    %161 = vmatprep.subr.mxu0 0.0
    %162 = vmatpush1.msra.mxu0 0.0
    %163 = vmatprep.subr.mxu0 0.0
    %164 = vmatpush1.msra.mxu0 0.0
    %165 = vmatprep.subr.mxu0 0.0
    %166 = vmatpush1.msra.mxu0 0.0
    %167 = vmatprep.subr.mxu0 0.0
    %168 = vmatpush1.msra.mxu0 0.0
    %169 = vmatprep.subr.mxu0 0.0
    %170 = vmatpush1.msra.mxu0 0.0
    %171 = vmatprep.subr.mxu0 0.0
    %172 = vmatpush1.msra.mxu0 0.0
    %173 = vmatprep.mubr.f32.mxu0 0.0
    %174 = vmatmul.mubr.f32.gmra.mrb[0].mxu0 %v94
    %v175 = vpop.f32.mrb[0].mxu0
    %v176 = vadd.f32 %v90, %v175
    %v177 = vpop.f32.mrb[0].mxu0
    %178 = vmatprep.mubr.f32.mxu0 0.0
    %179 = vmatmul.mubr.f32.gmra.mrb[0].mxu0 %v97
    %v180 = vpop.f32.mrb[0].mxu0
    %v181 = vadd.f32 %v90, %v180
    %v182 = vpop.f32.mrb[0].mxu0
    %183 = vmatprep.mubr.f32.mxu0 0.0
    %184 = vmatmul.mubr.f32.gmra.mrb[0].mxu0 %v100
    %v185 = vpop.f32.mrb[0].mxu0
    %v186 = vadd.f32 %v90, %v185
    %v187 = vpop.f32.mrb[0].mxu0
    %188 = vmatprep.mubr.f32.mxu0 0.0
    %189 = vmatmul.mubr.f32.gmra.mrb[0].mxu0 %v103
    %v190 = vpop.f32.mrb[0].mxu0
    %v191 = vadd.f32 %v90, %v190
    %v192 = vpop.f32.mrb[0].mxu0
    %193 = vdwg.mxu0
    %v194 = vmul.f32 %v176, 0.5
    %v195 = vmul.f32 %v181, 0.5
    %v196 = vmul.f32 %v186, 0.5
    %v197 = vmul.f32 %v191, 0.5
    %v198 = vmul.f32 %v176, 0.70710677
    %v199 = vmul.f32 %v181, 0.70710677
    %v200 = vmul.f32 %v186, 0.70710677
    %v201 = vmul.f32 %v191, 0.70710677
    %vm202 = vcmp.ge.f32.partialorder %v198, 0.0
    %vm203 = vcmp.ge.f32.partialorder %v199, 0.0
    %vm204 = vcmp.ge.f32.partialorder %v200, 0.0
    %vm205 = vcmp.ge.f32.partialorder %v201, 0.0
    %v206 = vsel %vm202, 1.0, -1.0
    %v207 = vsel %vm203, 1.0, -1.0
    %v208 = vsel %vm204, 1.0, -1.0
    %v209 = vsel %vm205, 1.0, -1.0
    %v210 = vand.u32 2147483647, %v198
    %v211 = vand.u32 2147483647, %v199
    %v212 = vand.u32 2147483647, %v200
    %v213 = vand.u32 2147483647, %v201
    %v214 = vmul.f32 %v210, 0.3275911
    %v215 = vmul.f32 %v211, 0.3275911
    %v216 = vmul.f32 %v212, 0.3275911
    %v217 = vmul.f32 %v213, 0.3275911
    %v218 = vadd.f32 %v214, 1.0
    %v219 = vadd.f32 %v215, 1.0
    %v220 = vadd.f32 %v216, 1.0
    %v221 = vadd.f32 %v217, 1.0
    %v222 = vrcp.pop %v218
    %v223 = vmul.f32 1.0, %v222
    %v224 = vrcp.pop %v219
    %v225 = vmul.f32 1.0, %v224
    %v226 = vrcp.pop %v220
    %v227 = vmul.f32 1.0, %v226
    %v228 = vrcp.pop %v221
    %v229 = vmul.f32 1.0, %v228
    %v230 = vmul.f32 %v223, 1.0614054
    %v231 = vmul.f32 %v225, 1.0614054
    %v232 = vmul.f32 %v227, 1.0614054
    %v233 = vmul.f32 %v229, 1.0614054
    %v234 = vadd.f32 %v230, -1.4531521
    %v235 = vadd.f32 %v231, -1.4531521
    %v236 = vadd.f32 %v232, -1.4531521
    %v237 = vadd.f32 %v233, -1.4531521
    %v238 = vmul.f32 %v234, %v223
    %v239 = vmul.f32 %v235, %v225
    %v240 = vmul.f32 %v236, %v227
    %v241 = vmul.f32 %v237, %v229
    %v242 = vadd.f32 %v238, 1.4214138
    %v243 = vadd.f32 %v239, 1.4214138
    %v244 = vadd.f32 %v240, 1.4214138
    %v245 = vadd.f32 %v241, 1.4214138
    %v246 = vmul.f32 %v242, %v223
    %v247 = vmul.f32 %v243, %v225
    %v248 = vmul.f32 %v244, %v227
    %v249 = vmul.f32 %v245, %v229
    %v250 = vadd.f32 %v246, -0.28449672
    %v251 = vadd.f32 %v247, -0.28449672
    %v252 = vadd.f32 %v248, -0.28449672
    %v253 = vadd.f32 %v249, -0.28449672
    %v254 = vmul.f32 %v250, %v223
    %v255 = vmul.f32 %v251, %v225
    %v256 = vmul.f32 %v252, %v227
    %v257 = vmul.f32 %v253, %v229
    %v258 = vadd.f32 %v254, 0.2548296
    %v259 = vadd.f32 %v255, 0.2548296
    %v260 = vadd.f32 %v256, 0.2548296
    %v261 = vadd.f32 %v257, 0.2548296
    %v262 = vmul.f32 %v258, %v223
    %v263 = vmul.f32 %v259, %v225
    %v264 = vmul.f32 %v260, %v227
    %v265 = vmul.f32 %v261, %v229
    %v266 = vsub.f32 0.0, %v210
    %v267 = vsub.f32 0.0, %v211
    %v268 = vsub.f32 0.0, %v212
    %v269 = vsub.f32 0.0, %v213
    %v270 = vmul.f32 %v266, %v210
    %v271 = vmul.f32 %v267, %v211
    %v272 = vmul.f32 %v268, %v212
    %v273 = vmul.f32 %v269, %v213
    %v274 = vmul.f32 %v270, 1.442695
    %v275 = vpow.pop %v274
    %v276 = vmul.f32 %v271, 1.442695
    %v277 = vpow.pop %v276
    %v278 = vmul.f32 %v272, 1.442695
    %v279 = vpow.pop %v278
    %v280 = vmul.f32 %v273, 1.442695
    %v281 = vpow.pop %v280
    %v282 = vmul.f32 %v262, %v275
    %v283 = vmul.f32 %v263, %v277
    %v284 = vmul.f32 %v264, %v279
    %v285 = vmul.f32 %v265, %v281
    %v286 = vsub.f32 1.0, %v282
    %v287 = vsub.f32 1.0, %v283
    %v288 = vsub.f32 1.0, %v284
    %v289 = vsub.f32 1.0, %v285
    %v290 = vmul.f32 %v206, %v286
    %v291 = vmul.f32 %v207, %v287
    %v292 = vmul.f32 %v208, %v288
    %v293 = vmul.f32 %v209, %v289
    %v294 = vadd.f32 %v290, 1.0
    %v295 = vadd.f32 %v291, 1.0
    %v296 = vadd.f32 %v292, 1.0
    %v297 = vadd.f32 %v293, 1.0
    %v298 = vmul.f32 %v194, %v294
    %v299 = vmul.f32 %v195, %v295
    %v300 = vmul.f32 %v196, %v296
    %v301 = vmul.f32 %v197, %v297
    %v302 = vld [vmem:[#allocation2] sm:$0xff]
    %v303 = vld [vmem:[#allocation2 + $0x8] sm:$0xff]
    %v304 = vld [vmem:[#allocation2 + $0x10] sm:$0xff]
    %v305 = vld [vmem:[#allocation2 + $0x18] sm:$0xff]
    %v306 = vld [vmem:[#allocation2 + $0x20] sm:$0xff]
    %v307 = vld [vmem:[#allocation2 + $0x28] sm:$0xff]
    %v308 = vld [vmem:[#allocation2 + $0x30] sm:$0xff]
    %v309 = vld [vmem:[#allocation2 + $0x38] sm:$0xff]
    %v310 = vld [vmem:[#allocation2 + $0x40] sm:$0xff]
    %v311 = vld [vmem:[#allocation2 + $0x48] sm:$0xff]
    %v312 = vld [vmem:[#allocation2 + $0x50] sm:$0xff]
    %v313 = vld [vmem:[#allocation2 + $0x58] sm:$0xff]
    %v314 = vld [vmem:[%s4] sm:$0x1]
    %vm320 = vcmask 1046528
    %v321 = vrot.slane %v298, 1
    %v322 = vrot.slane %v299, 1
    %v323 = vsel %vm320, %v321, %v322
    %v324 = vrot.slane %v300, 1
    %v325 = vsel %vm320, %v322, %v324
    %v326 = vrot.slane %v301, 1
    %v327 = vsel %vm320, %v324, %v326
    %v328 = vrot.slane 0.0, 1
    %v329 = vsel %vm320, %v326, %v328
    %330 = vrot.lane.b32.xlu0 %v323, 32
    %v331 = vpop.permute.xlu0 %330
    %332 = vrot.lane.b32.xlu0 %v325, 32
    %v333 = vpop.permute.xlu0 %332
    %334 = vrot.lane.b32.xlu0 %v327, 32
    %v335 = vpop.permute.xlu0 %334
    %336 = vrot.lane.b32.xlu0 %v329, 32
    %v337 = vpop.permute.xlu0 %336
    %vm342 = vcmask 1045504
    %v343 = vrot.slane %v298, 2
    %v344 = vrot.slane %v299, 2
    %v345 = vsel %vm342, %v343, %v344
    %v346 = vrot.slane %v300, 2
    %v347 = vsel %vm342, %v344, %v346
    %v348 = vrot.slane %v301, 2
    %v349 = vsel %vm342, %v346, %v348
    %v350 = vrot.slane 0.0, 2
    %v351 = vsel %vm342, %v348, %v350
    %352 = vrot.lane.b32.xlu0 %v345, 64
    %v353 = vpop.permute.xlu0 %352
    %354 = vrot.lane.b32.xlu0 %v347, 64
    %v355 = vpop.permute.xlu0 %354
    %356 = vrot.lane.b32.xlu0 %v349, 64
    %v357 = vpop.permute.xlu0 %356
    %358 = vrot.lane.b32.xlu0 %v351, 64
    %v359 = vpop.permute.xlu0 %358
    %vm364 = vcmask 261120
    %v365 = vsel %vm364, %v298, %v331
    %v366 = vsel %vm364, %v299, %v333
    %v367 = vsel %vm364, %v300, %v335
    %v368 = vsel %vm364, %v301, %v337
    %vm369 = vcmask 523264
    %v370 = vsel %vm369, %v365, %v353
    %v371 = vsel %vm369, %v366, %v355
    %v372 = vsel %vm369, %v367, %v357
    %v373 = vsel %vm369, %v368, %v359
    %v375 = vlaneseq
    %v376 = vshrl.u32 %v375, 7
    %v377 = vsub.s32 0, %v376
    %v378 = vrot.slane %v314, %v377
    %vm380 = vcmask 785408
    %v382 = vsel %vm380, %v370, 0
    %v385 = vsel %vm380, %v371, 0
    %v388 = vsel %vm380, %v372, 0
    %v391 = vsel %vm380, %v373, 0
    %393 = vmatprep.subr.mxu0 0.0
    %394 = vmatpush1.msra.mxu0 %v302
    %395 = vmatprep.subr.mxu0 0.0
    %396 = vmatpush1.msra.mxu0 %v303
    %397 = vmatprep.subr.mxu0 0.0
    %398 = vmatpush1.msra.mxu0 %v304
    %399 = vmatprep.subr.mxu0 0.0
    %400 = vmatpush1.msra.mxu0 %v305
    %401 = vmatprep.subr.mxu0 0.0
    %402 = vmatpush1.msra.mxu0 %v306
    %403 = vmatprep.subr.mxu0 0.0
    %404 = vmatpush1.msra.mxu0 %v307
    %405 = vmatprep.subr.mxu0 0.0
    %406 = vmatpush1.msra.mxu0 %v308
    %407 = vmatprep.subr.mxu0 0.0
    %408 = vmatpush1.msra.mxu0 %v309
    %409 = vmatprep.subr.mxu0 0.0
    %410 = vmatpush1.msra.mxu0 %v310
    %411 = vmatprep.subr.mxu0 0.0
    %412 = vmatpush1.msra.mxu0 %v311
    %413 = vmatprep.subr.mxu0 0.0
    %414 = vmatpush1.msra.mxu0 %v312
    %415 = vmatprep.subr.mxu0 0.0
    %416 = vmatpush1.msra.mxu0 %v313
    %417 = vmatprep.subr.mxu0 0.0
    %418 = vmatpush1.msra.mxu0 0.0
    %419 = vmatprep.subr.mxu0 0.0
    %420 = vmatpush1.msra.mxu0 0.0
    %421 = vmatprep.subr.mxu0 0.0
    %422 = vmatpush1.msra.mxu0 0.0
    %423 = vmatprep.subr.mxu0 0.0
    %424 = vmatpush1.msra.mxu0 0.0
    %425 = vmatprep.subr.mxu0 0.0
    %426 = vmatpush1.msra.mxu0 0.0
    %427 = vmatprep.subr.mxu0 0.0
    %428 = vmatpush1.msra.mxu0 0.0
    %429 = vmatprep.subr.mxu0 0.0
    %430 = vmatpush1.msra.mxu0 0.0
    %431 = vmatprep.subr.mxu0 0.0
    %432 = vmatpush1.msra.mxu0 0.0
    %433 = vmatprep.subr.mxu0 0.0
    %434 = vmatpush1.msra.mxu0 0.0
    %435 = vmatprep.subr.mxu0 0.0
    %436 = vmatpush1.msra.mxu0 0.0
    %437 = vmatprep.subr.mxu0 0.0
    %438 = vmatpush1.msra.mxu0 0.0
    %439 = vmatprep.subr.mxu0 0.0
    %440 = vmatpush1.msra.mxu0 0.0
    %441 = vmatprep.subr.mxu0 0.0
    %442 = vmatpush1.msra.mxu0 0.0
    %443 = vmatprep.subr.mxu0 0.0
    %444 = vmatpush1.msra.mxu0 0.0
    %445 = vmatprep.subr.mxu0 0.0
    %446 = vmatpush1.msra.mxu0 0.0
    %447 = vmatprep.subr.mxu0 0.0
    %448 = vmatpush1.msra.mxu0 0.0
    %449 = vmatprep.subr.mxu0 0.0
    %450 = vmatpush1.msra.mxu0 0.0
    %451 = vmatprep.subr.mxu0 0.0
    %452 = vmatpush1.msra.mxu0 0.0
    %453 = vmatprep.subr.mxu0 0.0
    %454 = vmatpush1.msra.mxu0 0.0
    %455 = vmatprep.subr.mxu0 0.0
    %456 = vmatpush1.msra.mxu0 0.0
    %457 = vmatprep.mubr.f32.mxu0 0.0
    %458 = vmatmul.mubr.f32.gmra.mrb[0].mxu0 %v382
    %v459 = vpop.f32.mrb[0].mxu0
    %v460 = vadd.f32 %v378, %v459
    %v461 = vpop.f32.mrb[0].mxu0
    %462 = vmatprep.mubr.f32.mxu0 0.0
    %463 = vmatmul.mubr.f32.gmra.mrb[0].mxu0 %v385
    %v464 = vpop.f32.mrb[0].mxu0
    %v465 = vadd.f32 %v378, %v464
    %v466 = vpop.f32.mrb[0].mxu0
    %467 = vmatprep.mubr.f32.mxu0 0.0
    %468 = vmatmul.mubr.f32.gmra.mrb[0].mxu0 %v388
    %v469 = vpop.f32.mrb[0].mxu0
    %v470 = vadd.f32 %v378, %v469
    %v471 = vpop.f32.mrb[0].mxu0
    %472 = vmatprep.mubr.f32.mxu0 0.0
    %473 = vmatmul.mubr.f32.gmra.mrb[0].mxu0 %v391
    %v474 = vpop.f32.mrb[0].mxu0
    %v475 = vadd.f32 %v378, %v474
    %v476 = vpop.f32.mrb[0].mxu0
    %477 = vdwg.mxu0
    %v478 = vmul.f32 %v460, 0.5
    %v479 = vmul.f32 %v465, 0.5
    %v480 = vmul.f32 %v470, 0.5
    %v481 = vmul.f32 %v475, 0.5
    %v482 = vmul.f32 %v460, 0.70710677
    %v483 = vmul.f32 %v465, 0.70710677
    %v484 = vmul.f32 %v470, 0.70710677
    %v485 = vmul.f32 %v475, 0.70710677
    %vm486 = vcmp.ge.f32.partialorder %v482, 0.0
    %vm487 = vcmp.ge.f32.partialorder %v483, 0.0
    %vm488 = vcmp.ge.f32.partialorder %v484, 0.0
    %vm489 = vcmp.ge.f32.partialorder %v485, 0.0
    %v490 = vsel %vm486, 1.0, -1.0
    %v491 = vsel %vm487, 1.0, -1.0
    %v492 = vsel %vm488, 1.0, -1.0
    %v493 = vsel %vm489, 1.0, -1.0
    %v494 = vand.u32 2147483647, %v482
    %v495 = vand.u32 2147483647, %v483
    %v496 = vand.u32 2147483647, %v484
    %v497 = vand.u32 2147483647, %v485
    %v498 = vmul.f32 %v494, 0.3275911
    %v499 = vmul.f32 %v495, 0.3275911
    %v500 = vmul.f32 %v496, 0.3275911
    %v501 = vmul.f32 %v497, 0.3275911
    %v502 = vadd.f32 %v498, 1.0
    %v503 = vadd.f32 %v499, 1.0
    %v504 = vadd.f32 %v500, 1.0
    %v505 = vadd.f32 %v501, 1.0
    %v506 = vrcp.pop %v502
    %v507 = vmul.f32 1.0, %v506
    %v508 = vrcp.pop %v503
    %v509 = vmul.f32 1.0, %v508
    %v510 = vrcp.pop %v504
    %v511 = vmul.f32 1.0, %v510
    %v512 = vrcp.pop %v505
    %v513 = vmul.f32 1.0, %v512
    %v514 = vmul.f32 %v507, 1.0614054
    %v515 = vmul.f32 %v509, 1.0614054
    %v516 = vmul.f32 %v511, 1.0614054
    %v517 = vmul.f32 %v513, 1.0614054
    %v518 = vadd.f32 %v514, -1.4531521
    %v519 = vadd.f32 %v515, -1.4531521
    %v520 = vadd.f32 %v516, -1.4531521
    %v521 = vadd.f32 %v517, -1.4531521
    %v522 = vmul.f32 %v518, %v507
    %v523 = vmul.f32 %v519, %v509
    %v524 = vmul.f32 %v520, %v511
    %v525 = vmul.f32 %v521, %v513
    %v526 = vadd.f32 %v522, 1.4214138
    %v527 = vadd.f32 %v523, 1.4214138
    %v528 = vadd.f32 %v524, 1.4214138
    %v529 = vadd.f32 %v525, 1.4214138
    %v530 = vmul.f32 %v526, %v507
    %v531 = vmul.f32 %v527, %v509
    %v532 = vmul.f32 %v528, %v511
    %v533 = vmul.f32 %v529, %v513
    %v534 = vadd.f32 %v530, -0.28449672
    %v535 = vadd.f32 %v531, -0.28449672
    %v536 = vadd.f32 %v532, -0.28449672
    %v537 = vadd.f32 %v533, -0.28449672
    %v538 = vmul.f32 %v534, %v507
    %v539 = vmul.f32 %v535, %v509
    %v540 = vmul.f32 %v536, %v511
    %v541 = vmul.f32 %v537, %v513
    %v542 = vadd.f32 %v538, 0.2548296
    %v543 = vadd.f32 %v539, 0.2548296
    %v544 = vadd.f32 %v540, 0.2548296
    %v545 = vadd.f32 %v541, 0.2548296
    %v546 = vmul.f32 %v542, %v507
    %v547 = vmul.f32 %v543, %v509
    %v548 = vmul.f32 %v544, %v511
    %v549 = vmul.f32 %v545, %v513
    %v550 = vsub.f32 0.0, %v494
    %v551 = vsub.f32 0.0, %v495
    %v552 = vsub.f32 0.0, %v496
    %v553 = vsub.f32 0.0, %v497
    %v554 = vmul.f32 %v550, %v494
    %v555 = vmul.f32 %v551, %v495
    %v556 = vmul.f32 %v552, %v496
    %v557 = vmul.f32 %v553, %v497
    %v558 = vmul.f32 %v554, 1.442695
    %v559 = vpow.pop %v558
    %v560 = vmul.f32 %v555, 1.442695
    %v561 = vpow.pop %v560
    %v562 = vmul.f32 %v556, 1.442695
    %v563 = vpow.pop %v562
    %v564 = vmul.f32 %v557, 1.442695
    %v565 = vpow.pop %v564
    %v566 = vmul.f32 %v546, %v559
    %v567 = vmul.f32 %v547, %v561
    %v568 = vmul.f32 %v548, %v563
    %v569 = vmul.f32 %v549, %v565
    %v570 = vsub.f32 1.0, %v566
    %v571 = vsub.f32 1.0, %v567
    %v572 = vsub.f32 1.0, %v568
    %v573 = vsub.f32 1.0, %v569
    %v574 = vmul.f32 %v490, %v570
    %v575 = vmul.f32 %v491, %v571
    %v576 = vmul.f32 %v492, %v572
    %v577 = vmul.f32 %v493, %v573
    %v578 = vadd.f32 %v574, 1.0
    %v579 = vadd.f32 %v575, 1.0
    %v580 = vadd.f32 %v576, 1.0
    %v581 = vadd.f32 %v577, 1.0
    %v582 = vmul.f32 %v478, %v578
    %v583 = vmul.f32 %v479, %v579
    %v584 = vmul.f32 %v480, %v580
    %v585 = vmul.f32 %v481, %v581
    %v586 = vld [vmem:[#allocation5] sm:$0xff]
    %v587 = vld [vmem:[#allocation5 + $0x8] sm:$0xff]
    %v588 = vld [vmem:[#allocation5 + $0x10] sm:$0xff]
    %v589 = vld [vmem:[#allocation5 + $0x18] sm:$0xff]
    %v590 = vld [vmem:[#allocation5 + $0x20] sm:$0xff]
    %v591 = vld [vmem:[#allocation5 + $0x28] sm:$0xff]
    %v592 = vld [vmem:[#allocation5 + $0x30] sm:$0xff]
    %v593 = vld [vmem:[#allocation5 + $0x38] sm:$0xff]
    %v594 = vld [vmem:[#allocation5 + $0x40] sm:$0xff]
    %v595 = vld [vmem:[#allocation5 + $0x48] sm:$0xff]
    %v596 = vld [vmem:[#allocation5 + $0x50] sm:$0xff]
    %v597 = vld [vmem:[#allocation5 + $0x58] sm:$0xff]
    %v598 = vld [vmem:[#allocation5 + $0x60] sm:$0xff]
    %v599 = vld [vmem:[#allocation5 + $0x68] sm:$0xff]
    %v600 = vld [vmem:[#allocation5 + $0x70] sm:$0xff]
    %v601 = vld [vmem:[#allocation5 + $0x78] sm:$0xff]
    %v602 = vld [vmem:[#allocation5 + $0x80] sm:$0xff]
    %v603 = vld [vmem:[#allocation5 + $0x88] sm:$0xff]
    %v604 = vld [vmem:[#allocation5 + $0x90] sm:$0xff]
    %v605 = vld [vmem:[#allocation5 + $0x98] sm:$0xff]
    %v606 = vld [vmem:[#allocation5 + $0xa0] sm:$0xff]
    %v607 = vld [vmem:[#allocation5 + $0xa8] sm:$0xff]
    %v608 = vld [vmem:[#allocation5 + $0xb0] sm:$0xff]
    %v609 = vld [vmem:[#allocation5 + $0xb8] sm:$0xff]
    %v610 = vld [vmem:[#allocation5 + $0xc0] sm:$0xff]
    %v611 = vld [vmem:[#allocation5 + $0xc8] sm:$0xff]
    %v612 = vld [vmem:[#allocation5 + $0xd0] sm:$0xff]
    %v613 = vld [vmem:[#allocation5 + $0xd8] sm:$0xff]
    %v614 = vld [vmem:[#allocation5 + $0xe0] sm:$0xff]
    %v615 = vld [vmem:[#allocation5 + $0xe8] sm:$0xff]
    %v616 = vld [vmem:[#allocation5 + $0xf0] sm:$0xff]
    %v617 = vld [vmem:[#allocation5 + $0xf8] sm:$0xff]
    %v618 = vld [vmem:[#allocation5 + $0x100] sm:$0xff]
    %v619 = vld [vmem:[#allocation5 + $0x108] sm:$0xff]
    %v620 = vld [vmem:[#allocation5 + $0x110] sm:$0xff]
    %v621 = vld [vmem:[#allocation5 + $0x118] sm:$0xff]
    %v622 = vld [vmem:[#allocation5 + $0x120] sm:$0xff]
    %v623 = vld [vmem:[#allocation5 + $0x128] sm:$0xff]
    %v624 = vld [vmem:[#allocation5 + $0x130] sm:$0xff]
    %v625 = vld [vmem:[#allocation5 + $0x138] sm:$0xff]
    %v626 = vld [vmem:[#allocation5 + $0x140] sm:$0xff]
    %v627 = vld [vmem:[#allocation5 + $0x148] sm:$0xff]
    %v628 = vld [vmem:[#allocation5 + $0x150] sm:$0xff]
    %v629 = vld [vmem:[#allocation5 + $0x158] sm:$0xff]
    %v630 = vld [vmem:[#allocation5 + $0x160] sm:$0xff]
    %v631 = vld [vmem:[#allocation5 + $0x168] sm:$0xff]
    %v632 = vld [vmem:[#allocation5 + $0x170] sm:$0xff]
    %v633 = vld [vmem:[#allocation5 + $0x178] sm:$0xff]
    %v634 = vld [vmem:[%s6] sm:$0x1]
    %v639 = vrot.slane %v582, 1
    %v640 = vrot.slane %v583, 1
    %v641 = vsel %vm320, %v639, %v640
    %v642 = vrot.slane %v584, 1
    %v643 = vsel %vm320, %v640, %v642
    %v644 = vrot.slane %v585, 1
    %v645 = vsel %vm320, %v642, %v644
    %v646 = vsel %vm320, %v644, %v328
    %v651 = vrot.slane %v582, 2
    %v652 = vrot.slane %v583, 2
    %v653 = vsel %vm342, %v651, %v652
    %v654 = vrot.slane %v584, 2
    %v655 = vsel %vm342, %v652, %v654
    %v656 = vrot.slane %v585, 2
    %v657 = vsel %vm342, %v654, %v656
    %v658 = vsel %vm342, %v656, %v350
    %v664 = vlaneseq
    %v665 = vshrl.u32 %v664, 7
    %v666 = vsub.s32 0, %v665
    %v667 = vrot.slane %v634, %v666
    %669 = vmatprep.subr.mxu0 0.0
    %670 = vmatpush1.msra.mxu0 %v586
    %671 = vmatprep.subr.mxu0 0.0
    %672 = vmatpush1.msra.mxu0 %v587
    %673 = vmatprep.subr.mxu0 0.0
    %674 = vmatpush1.msra.mxu0 %v588
    %675 = vmatprep.subr.mxu0 0.0
    %676 = vmatpush1.msra.mxu0 %v589
    %677 = vmatprep.subr.mxu0 0.0
    %678 = vmatpush1.msra.mxu0 %v590
    %679 = vmatprep.subr.mxu0 0.0
    %680 = vmatpush1.msra.mxu0 %v591
    %681 = vmatprep.subr.mxu0 0.0
    %682 = vmatpush1.msra.mxu0 %v592
    %683 = vmatprep.subr.mxu0 0.0
    %684 = vmatpush1.msra.mxu0 %v593
    %685 = vmatprep.subr.mxu0 0.0
    %686 = vmatpush1.msra.mxu0 %v594
    %687 = vmatprep.subr.mxu0 0.0
    %688 = vmatpush1.msra.mxu0 %v595
    %689 = vmatprep.subr.mxu0 0.0
    %690 = vmatpush1.msra.mxu0 %v596
    %691 = vmatprep.subr.mxu0 0.0
    %692 = vmatpush1.msra.mxu0 %v597
    %693 = vmatprep.subr.mxu0 0.0
    %694 = vmatpush1.msra.mxu0 %v598
    %695 = vmatprep.subr.mxu0 0.0
    %696 = vmatpush1.msra.mxu0 %v599
    %697 = vmatprep.subr.mxu0 0.0
    %698 = vmatpush1.msra.mxu0 %v600
    %699 = vmatprep.subr.mxu0 0.0
    %700 = vmatpush1.msra.mxu0 %v601
    %701 = vmatprep.subr.mxu0 0.0
    %702 = vmatpush1.msra.mxu0 %v602
    %703 = vmatprep.subr.mxu0 0.0
    %704 = vmatpush1.msra.mxu0 %v603
    %705 = vmatprep.subr.mxu0 0.0
    %706 = vmatpush1.msra.mxu0 %v604
    %707 = vmatprep.subr.mxu0 0.0
    %708 = vmatpush1.msra.mxu0 %v605
    %709 = vmatprep.subr.mxu0 0.0
    %710 = vmatpush1.msra.mxu0 %v606
    %711 = vmatprep.subr.mxu0 0.0
    %712 = vmatpush1.msra.mxu0 %v607
    %713 = vmatprep.subr.mxu0 0.0
    %714 = vmatpush1.msra.mxu0 %v608
    %715 = vmatprep.subr.mxu0 0.0
    %716 = vmatpush1.msra.mxu0 %v609
    %717 = vmatprep.subr.mxu0 0.0
    %718 = vmatpush1.msra.mxu0 %v610
    %719 = vmatprep.subr.mxu0 0.0
    %720 = vmatpush1.msra.mxu0 %v611
    %721 = vmatprep.subr.mxu0 0.0
    %722 = vmatpush1.msra.mxu0 %v612
    %723 = vmatprep.subr.mxu0 0.0
    %724 = vmatpush1.msra.mxu0 %v613
    %725 = vmatprep.subr.mxu0 0.0
    %726 = vmatpush1.msra.mxu0 %v614
    %727 = vmatprep.subr.mxu0 0.0
    %728 = vmatpush1.msra.mxu0 %v615
    %729 = vmatprep.subr.mxu0 0.0
    %730 = vmatpush1.msra.mxu0 %v616
    %731 = vmatprep.subr.mxu0 0.0
    %732 = vmatpush1.msra.mxu0 %v617
    %733 = vmatprep.mubr.f32.mxu0 %v641
    %734 = vmatmul.mubr.f32.gmra.mrb[0].mxu0 %v582
    %v735 = vpop.f32.mrb[0].mxu0
    %v736 = vadd.f32 %v667, %v735
    %v737 = vpop.f32.mrb[0].mxu0
    %738 = vmatprep.mubr.f32.mxu0 %v643
    %739 = vmatmul.mubr.f32.gmra.mrb[0].mxu0 %v583
    %v740 = vpop.f32.mrb[0].mxu0
    %v741 = vadd.f32 %v667, %v740
    %v742 = vpop.f32.mrb[0].mxu0
    %743 = vmatprep.mubr.f32.mxu0 %v645
    %744 = vmatmul.mubr.f32.gmra.mrb[0].mxu0 %v584
    %v745 = vpop.f32.mrb[0].mxu0
    %v746 = vadd.f32 %v667, %v745
    %v747 = vpop.f32.mrb[0].mxu0
    %748 = vmatprep.mubr.f32.mxu0 %v646
    %749 = vmatmul.mubr.f32.gmra.mrb[0].mxu0 %v585
    %v750 = vpop.f32.mrb[0].mxu0
    %v751 = vadd.f32 %v667, %v750
    %v752 = vpop.f32.mrb[0].mxu0
    %753 = vdwg.mxu0
    %754 = vmatprep.subr.mxu0 0.0
    %755 = vmatpush1.msra.mxu0 %v618
    %756 = vmatprep.subr.mxu0 0.0
    %757 = vmatpush1.msra.mxu0 %v619
    %758 = vmatprep.subr.mxu0 0.0
    %759 = vmatpush1.msra.mxu0 %v620
    %760 = vmatprep.subr.mxu0 0.0
    %761 = vmatpush1.msra.mxu0 %v621
    %762 = vmatprep.subr.mxu0 0.0
    %763 = vmatpush1.msra.mxu0 %v622
    %764 = vmatprep.subr.mxu0 0.0
    %765 = vmatpush1.msra.mxu0 %v623
    %766 = vmatprep.subr.mxu0 0.0
    %767 = vmatpush1.msra.mxu0 %v624
    %768 = vmatprep.subr.mxu0 0.0
    %769 = vmatpush1.msra.mxu0 %v625
    %770 = vmatprep.subr.mxu0 0.0
    %771 = vmatpush1.msra.mxu0 %v626
    %772 = vmatprep.subr.mxu0 0.0
    %773 = vmatpush1.msra.mxu0 %v627
    %774 = vmatprep.subr.mxu0 0.0
    %775 = vmatpush1.msra.mxu0 %v628
    %776 = vmatprep.subr.mxu0 0.0
    %777 = vmatpush1.msra.mxu0 %v629
    %778 = vmatprep.subr.mxu0 0.0
    %779 = vmatpush1.msra.mxu0 %v630
    %780 = vmatprep.subr.mxu0 0.0
    %781 = vmatpush1.msra.mxu0 %v631
    %782 = vmatprep.subr.mxu0 0.0
    %783 = vmatpush1.msra.mxu0 %v632
    %784 = vmatprep.subr.mxu0 0.0
    %785 = vmatpush1.msra.mxu0 %v633
    %786 = vmatprep.subr.mxu0 0.0
    %787 = vmatpush1.msra.mxu0 0.0
    %788 = vmatprep.subr.mxu0 0.0
    %789 = vmatpush1.msra.mxu0 0.0
    %790 = vmatprep.subr.mxu0 0.0
    %791 = vmatpush1.msra.mxu0 0.0
    %792 = vmatprep.subr.mxu0 0.0
    %793 = vmatpush1.msra.mxu0 0.0
    %794 = vmatprep.subr.mxu0 0.0
    %795 = vmatpush1.msra.mxu0 0.0
    %796 = vmatprep.subr.mxu0 0.0
    %797 = vmatpush1.msra.mxu0 0.0
    %798 = vmatprep.subr.mxu0 0.0
    %799 = vmatpush1.msra.mxu0 0.0
    %800 = vmatprep.subr.mxu0 0.0
    %801 = vmatpush1.msra.mxu0 0.0
    %802 = vmatprep.subr.mxu0 0.0
    %803 = vmatpush1.msra.mxu0 0.0
    %804 = vmatprep.subr.mxu0 0.0
    %805 = vmatpush1.msra.mxu0 0.0
    %806 = vmatprep.subr.mxu0 0.0
    %807 = vmatpush1.msra.mxu0 0.0
    %808 = vmatprep.subr.mxu0 0.0
    %809 = vmatpush1.msra.mxu0 0.0
    %810 = vmatprep.subr.mxu0 0.0
    %811 = vmatpush1.msra.mxu0 0.0
    %812 = vmatprep.subr.mxu0 0.0
    %813 = vmatpush1.msra.mxu0 0.0
    %814 = vmatprep.subr.mxu0 0.0
    %815 = vmatpush1.msra.mxu0 0.0
    %816 = vmatprep.subr.mxu0 0.0
    %817 = vmatpush1.msra.mxu0 0.0
    %818 = vmatprep.mubr.f32.mxu0 0.0
    %819 = vmatmul.mubr.f32.gmra.mrb[0].mxu0 %v653
    %v820 = vpop.f32.mrb[0].mxu0
    %v821 = vadd.f32 %v736, %v820
    %v822 = vpop.f32.mrb[0].mxu0
    %823 = vmatprep.mubr.f32.mxu0 0.0
    %824 = vmatmul.mubr.f32.gmra.mrb[0].mxu0 %v655
    %v825 = vpop.f32.mrb[0].mxu0
    %v826 = vadd.f32 %v741, %v825
    %v827 = vpop.f32.mrb[0].mxu0
    %828 = vmatprep.mubr.f32.mxu0 0.0
    %829 = vmatmul.mubr.f32.gmra.mrb[0].mxu0 %v657
    %v830 = vpop.f32.mrb[0].mxu0
    %v831 = vadd.f32 %v746, %v830
    %v832 = vpop.f32.mrb[0].mxu0
    %833 = vmatprep.mubr.f32.mxu0 0.0
    %834 = vmatmul.mubr.f32.gmra.mrb[0].mxu0 %v658
    %v835 = vpop.f32.mrb[0].mxu0
    %v836 = vadd.f32 %v751, %v835
    %v837 = vpop.f32.mrb[0].mxu0
    %838 = vdwg.mxu0
    %v839 = vld [vmem:[%s9] sm:$0xff]
    %v840 = vld [vmem:[%s9 + $0x8] sm:$0xff]
    %v841 = vld [vmem:[%s9 + $0x10] sm:$0xff]
    %v842 = vld [vmem:[%s9 + $0x18] sm:$0xff]
    %v847 = vrot.slane %v821, 1
    %v848 = vrot.slane %v826, 1
    %v849 = vsel %vm320, %v847, %v848
    %v850 = vrot.slane %v831, 1
    %v851 = vsel %vm320, %v848, %v850
    %v852 = vrot.slane %v836, 1
    %v853 = vsel %vm320, %v850, %v852
    %v854 = vsel %vm320, %v852, %v328
    %v859 = vmax.f32 %v821, %v849
    %v860 = vmax.f32 %v826, %v851
    %v861 = vmax.f32 %v831, %v853
    %v862 = vmax.f32 %v836, %v854
    %v863 = vrot.slane %v821, 2
    %v864 = vrot.slane %v826, 2
    %v865 = vsel %vm342, %v863, %v864
    %v866 = vrot.slane %v831, 2
    %v867 = vsel %vm342, %v864, %v866
    %v868 = vrot.slane %v836, 2
    %v869 = vsel %vm342, %v866, %v868
    %v870 = vsel %vm342, %v868, %v350
    %v875 = vmax.f32 %v859, %v865
    %v876 = vmax.f32 %v860, %v867
    %v877 = vmax.f32 %v861, %v869
    %v878 = vmax.f32 %v862, %v870
    %v880 = vsel %vm364, %v839, 0
    %v883 = vsel %vm364, %v840, 0
    %v886 = vsel %vm364, %v841, 0
    %v889 = vsel %vm364, %v842, 0
    %891 = vmatprep.subr.mxu0 0.0
    %892 = vmatpush1.msra.mxu0 %v875
    %893 = vmatprep.subr.mxu0 0.0
    %894 = vmatpush1.msra.mxu0 %v876
    %895 = vmatprep.subr.mxu0 0.0
    %896 = vmatpush1.msra.mxu0 %v877
    %897 = vmatprep.subr.mxu0 0.0
    %898 = vmatpush1.msra.mxu0 %v878
    %899 = vmatprep.subr.mxu0 0.0
    %900 = vmatpush1.msra.mxu0 0.0
    %901 = vmatprep.subr.mxu0 0.0
    %902 = vmatpush1.msra.mxu0 0.0
    %903 = vmatprep.subr.mxu0 0.0
    %904 = vmatpush1.msra.mxu0 0.0
    %905 = vmatprep.subr.mxu0 0.0
    %906 = vmatpush1.msra.mxu0 0.0
    %907 = vmatprep.subr.mxu0 0.0
    %908 = vmatpush1.msra.mxu0 0.0
    %909 = vmatprep.subr.mxu0 0.0
    %910 = vmatpush1.msra.mxu0 0.0
    %911 = vmatprep.subr.mxu0 0.0
    %912 = vmatpush1.msra.mxu0 0.0
    %913 = vmatprep.subr.mxu0 0.0
    %914 = vmatpush1.msra.mxu0 0.0
    %915 = vmatprep.subr.mxu0 0.0
    %916 = vmatpush1.msra.mxu0 0.0
    %917 = vmatprep.subr.mxu0 0.0
    %918 = vmatpush1.msra.mxu0 0.0
    %919 = vmatprep.subr.mxu0 0.0
    %920 = vmatpush1.msra.mxu0 0.0
    %921 = vmatprep.subr.mxu0 0.0
    %922 = vmatpush1.msra.mxu0 0.0
    %923 = vmatprep.subr.mxu0 0.0
    %924 = vmatpush1.msra.mxu0 0.0
    %925 = vmatprep.subr.mxu0 0.0
    %926 = vmatpush1.msra.mxu0 0.0
    %927 = vmatprep.subr.mxu0 0.0
    %928 = vmatpush1.msra.mxu0 0.0
    %929 = vmatprep.subr.mxu0 0.0
    %930 = vmatpush1.msra.mxu0 0.0
    %931 = vmatprep.subr.mxu0 0.0
    %932 = vmatpush1.msra.mxu0 0.0
    %933 = vmatprep.subr.mxu0 0.0
    %934 = vmatpush1.msra.mxu0 0.0
    %935 = vmatprep.subr.mxu0 0.0
    %936 = vmatpush1.msra.mxu0 0.0
    %937 = vmatprep.subr.mxu0 0.0
    %938 = vmatpush1.msra.mxu0 0.0
    %939 = vmatprep.subr.mxu0 0.0
    %940 = vmatpush1.msra.mxu0 0.0
    %941 = vmatprep.subr.mxu0 0.0
    %942 = vmatpush1.msra.mxu0 0.0
    %943 = vmatprep.subr.mxu0 0.0
    %944 = vmatpush1.msra.mxu0 0.0
    %945 = vmatprep.subr.mxu0 0.0
    %946 = vmatpush1.msra.mxu0 0.0
    %947 = vmatprep.subr.mxu0 0.0
    %948 = vmatpush1.msra.mxu0 0.0
    %949 = vmatprep.subr.mxu0 0.0
    %950 = vmatpush1.msra.mxu0 0.0
    %951 = vmatprep.subr.mxu0 0.0
    %952 = vmatpush1.msra.mxu0 0.0
    %953 = vmatprep.subr.mxu0 0.0
    %954 = vmatpush1.msra.mxu0 0.0
    %955 = vmatprep.mubr.f32.mxu0 0.0
    %956 = vmatmul.mubr.f32.gmra.mrb[0].mxu0 %v880
    %v957 = vpop.f32.mrb[0].mxu0
    %v958 = vadd.f32 0.0, %v957
    %v959 = vpop.f32.mrb[0].mxu0
    %960 = vmatprep.mubr.f32.mxu0 0.0
    %961 = vmatmul.mubr.f32.gmra.mrb[0].mxu0 %v883
    %v962 = vpop.f32.mrb[0].mxu0
    %v963 = vadd.f32 0.0, %v962
    %v964 = vpop.f32.mrb[0].mxu0
    %965 = vmatprep.mubr.f32.mxu0 0.0
    %966 = vmatmul.mubr.f32.gmra.mrb[0].mxu0 %v886
    %v967 = vpop.f32.mrb[0].mxu0
    %v968 = vadd.f32 0.0, %v967
    %v969 = vpop.f32.mrb[0].mxu0
    %970 = vmatprep.mubr.f32.mxu0 0.0
    %971 = vmatmul.mubr.f32.gmra.mrb[0].mxu0 %v889
    %v972 = vpop.f32.mrb[0].mxu0
    %v973 = vadd.f32 0.0, %v972
    %v974 = vpop.f32.mrb[0].mxu0
    %975 = vdwg.mxu0
    %v976 = vmul.f32 %v958, 0.5
    %v977 = vmul.f32 %v963, 0.5
    %v978 = vmul.f32 %v968, 0.5
    %v979 = vmul.f32 %v973, 0.5
    %v980 = vmul.f32 %v958, 0.70710677
    %v981 = vmul.f32 %v963, 0.70710677
    %v982 = vmul.f32 %v968, 0.70710677
    %v983 = vmul.f32 %v973, 0.70710677
    %vm984 = vcmp.ge.f32.partialorder %v980, 0.0
    %vm985 = vcmp.ge.f32.partialorder %v981, 0.0
    %vm986 = vcmp.ge.f32.partialorder %v982, 0.0
    %vm987 = vcmp.ge.f32.partialorder %v983, 0.0
    %v988 = vsel %vm984, 1.0, -1.0
    %v989 = vsel %vm985, 1.0, -1.0
    %v990 = vsel %vm986, 1.0, -1.0
    %v991 = vsel %vm987, 1.0, -1.0
    %v992 = vand.u32 2147483647, %v980
    %v993 = vand.u32 2147483647, %v981
    %v994 = vand.u32 2147483647, %v982
    %v995 = vand.u32 2147483647, %v983
    %v996 = vmul.f32 %v992, 0.3275911
    %v997 = vmul.f32 %v993, 0.3275911
    %v998 = vmul.f32 %v994, 0.3275911
    %v999 = vmul.f32 %v995, 0.3275911
    %v1000 = vadd.f32 %v996, 1.0
    %v1001 = vadd.f32 %v997, 1.0
    %v1002 = vadd.f32 %v998, 1.0
    %v1003 = vadd.f32 %v999, 1.0
    %v1004 = vrcp.pop %v1000
    %v1005 = vmul.f32 1.0, %v1004
    %v1006 = vrcp.pop %v1001
    %v1007 = vmul.f32 1.0, %v1006
    %v1008 = vrcp.pop %v1002
    %v1009 = vmul.f32 1.0, %v1008
    %v1010 = vrcp.pop %v1003
    %v1011 = vmul.f32 1.0, %v1010
    %v1012 = vmul.f32 %v1005, 1.0614054
    %v1013 = vmul.f32 %v1007, 1.0614054
    %v1014 = vmul.f32 %v1009, 1.0614054
    %v1015 = vmul.f32 %v1011, 1.0614054
    %v1016 = vadd.f32 %v1012, -1.4531521
    %v1017 = vadd.f32 %v1013, -1.4531521
    %v1018 = vadd.f32 %v1014, -1.4531521
    %v1019 = vadd.f32 %v1015, -1.4531521
    %v1020 = vmul.f32 %v1016, %v1005
    %v1021 = vmul.f32 %v1017, %v1007
    %v1022 = vmul.f32 %v1018, %v1009
    %v1023 = vmul.f32 %v1019, %v1011
    %v1024 = vadd.f32 %v1020, 1.4214138
    %v1025 = vadd.f32 %v1021, 1.4214138
    %v1026 = vadd.f32 %v1022, 1.4214138
    %v1027 = vadd.f32 %v1023, 1.4214138
    %v1028 = vmul.f32 %v1024, %v1005
    %v1029 = vmul.f32 %v1025, %v1007
    %v1030 = vmul.f32 %v1026, %v1009
    %v1031 = vmul.f32 %v1027, %v1011
    %v1032 = vadd.f32 %v1028, -0.28449672
    %v1033 = vadd.f32 %v1029, -0.28449672
    %v1034 = vadd.f32 %v1030, -0.28449672
    %v1035 = vadd.f32 %v1031, -0.28449672
    %v1036 = vmul.f32 %v1032, %v1005
    %v1037 = vmul.f32 %v1033, %v1007
    %v1038 = vmul.f32 %v1034, %v1009
    %v1039 = vmul.f32 %v1035, %v1011
    %v1040 = vadd.f32 %v1036, 0.2548296
    %v1041 = vadd.f32 %v1037, 0.2548296
    %v1042 = vadd.f32 %v1038, 0.2548296
    %v1043 = vadd.f32 %v1039, 0.2548296
    %v1044 = vmul.f32 %v1040, %v1005
    %v1045 = vmul.f32 %v1041, %v1007
    %v1046 = vmul.f32 %v1042, %v1009
    %v1047 = vmul.f32 %v1043, %v1011
    %v1048 = vsub.f32 0.0, %v992
    %v1049 = vsub.f32 0.0, %v993
    %v1050 = vsub.f32 0.0, %v994
    %v1051 = vsub.f32 0.0, %v995
    %v1052 = vmul.f32 %v1048, %v992
    %v1053 = vmul.f32 %v1049, %v993
    %v1054 = vmul.f32 %v1050, %v994
    %v1055 = vmul.f32 %v1051, %v995
    %v1056 = vmul.f32 %v1052, 1.442695
    %v1057 = vpow.pop %v1056
    %v1058 = vmul.f32 %v1053, 1.442695
    %v1059 = vpow.pop %v1058
    %v1060 = vmul.f32 %v1054, 1.442695
    %v1061 = vpow.pop %v1060
    %v1062 = vmul.f32 %v1055, 1.442695
    %v1063 = vpow.pop %v1062
    %v1064 = vmul.f32 %v1044, %v1057
    %v1065 = vmul.f32 %v1045, %v1059
    %v1066 = vmul.f32 %v1046, %v1061
    %v1067 = vmul.f32 %v1047, %v1063
    %v1068 = vsub.f32 1.0, %v1064
    %v1069 = vsub.f32 1.0, %v1065
    %v1070 = vsub.f32 1.0, %v1066
    %v1071 = vsub.f32 1.0, %v1067
    %v1072 = vmul.f32 %v988, %v1068
    %v1073 = vmul.f32 %v989, %v1069
    %v1074 = vmul.f32 %v990, %v1070
    %v1075 = vmul.f32 %v991, %v1071
    %v1076 = vadd.f32 %v1072, 1.0
    %v1077 = vadd.f32 %v1073, 1.0
    %v1078 = vadd.f32 %v1074, 1.0
    %v1079 = vadd.f32 %v1075, 1.0
    %v1080 = vmul.f32 %v976, %v1076
    %v1081 = vmul.f32 %v977, %v1077
    %v1082 = vmul.f32 %v978, %v1078
    %v1083 = vmul.f32 %v979, %v1079
    %v1084 = vld [vmem:[#allocation7] sm:$0xff]
    %v1085 = vld [vmem:[#allocation7 + $0x8] sm:$0xff]
    %v1086 = vld [vmem:[#allocation7 + $0x10] sm:$0xff]
    %v1087 = vld [vmem:[#allocation7 + $0x18] sm:$0xff]
    %v1088 = vld [vmem:[#allocation7 + $0x20] sm:$0xff]
    %v1089 = vld [vmem:[#allocation7 + $0x28] sm:$0xff]
    %v1090 = vld [vmem:[#allocation7 + $0x30] sm:$0xff]
    %v1091 = vld [vmem:[#allocation7 + $0x38] sm:$0xff]
    %v1092 = vld [vmem:[#allocation7 + $0x40] sm:$0xff]
    %v1093 = vld [vmem:[#allocation7 + $0x48] sm:$0xff]
    %v1094 = vld [vmem:[#allocation7 + $0x50] sm:$0xff]
    %v1095 = vld [vmem:[#allocation7 + $0x58] sm:$0xff]
    %v1096 = vld [vmem:[#allocation7 + $0x60] sm:$0xff]
    %v1097 = vld [vmem:[#allocation7 + $0x68] sm:$0xff]
    %v1098 = vld [vmem:[#allocation7 + $0x70] sm:$0xff]
    %v1099 = vld [vmem:[#allocation7 + $0x78] sm:$0xff]
    %v1100 = vld [vmem:[#allocation7 + $0x80] sm:$0xff]
    %v1101 = vld [vmem:[#allocation7 + $0x88] sm:$0xff]
    %v1102 = vld [vmem:[#allocation7 + $0x90] sm:$0xff]
    %v1103 = vld [vmem:[#allocation7 + $0x98] sm:$0xff]
    %v1104 = vld [vmem:[#allocation7 + $0xa0] sm:$0xff]
    %v1105 = vld [vmem:[#allocation7 + $0xa8] sm:$0xff]
    %v1106 = vld [vmem:[#allocation7 + $0xb0] sm:$0xff]
    %v1107 = vld [vmem:[#allocation7 + $0xb8] sm:$0xff]
    %v1108 = vld [vmem:[#allocation7 + $0xc0] sm:$0xff]
    %v1109 = vld [vmem:[#allocation7 + $0xc8] sm:$0xff]
    %v1110 = vld [vmem:[#allocation7 + $0xd0] sm:$0xff]
    %v1111 = vld [vmem:[#allocation7 + $0xd8] sm:$0xff]
    %v1112 = vld [vmem:[#allocation7 + $0xe0] sm:$0xff]
    %v1113 = vld [vmem:[#allocation7 + $0xe8] sm:$0xff]
    %v1114 = vld [vmem:[#allocation7 + $0xf0] sm:$0xff]
    %v1115 = vld [vmem:[#allocation7 + $0xf8] sm:$0xff]
    %v1116 = vld [vmem:[#allocation7 + $0x100] sm:$0xff]
    %v1117 = vld [vmem:[#allocation7 + $0x108] sm:$0xff]
    %v1118 = vld [vmem:[#allocation7 + $0x110] sm:$0xff]
    %v1119 = vld [vmem:[#allocation7 + $0x118] sm:$0xff]
    %v1120 = vld [vmem:[#allocation7 + $0x120] sm:$0xff]
    %v1121 = vld [vmem:[#allocation7 + $0x128] sm:$0xff]
    %v1122 = vld [vmem:[#allocation7 + $0x130] sm:$0xff]
    %v1123 = vld [vmem:[#allocation7 + $0x138] sm:$0xff]
    %v1124 = vld [vmem:[#allocation7 + $0x140] sm:$0xff]
    %v1125 = vld [vmem:[#allocation7 + $0x148] sm:$0xff]
    %v1126 = vld [vmem:[#allocation7 + $0x150] sm:$0xff]
    %v1127 = vld [vmem:[#allocation7 + $0x158] sm:$0xff]
    %v1128 = vld [vmem:[#allocation7 + $0x160] sm:$0xff]
    %v1129 = vld [vmem:[#allocation7 + $0x168] sm:$0xff]
    %v1130 = vld [vmem:[#allocation7 + $0x170] sm:$0xff]
    %v1131 = vld [vmem:[#allocation7 + $0x178] sm:$0xff]
    %v1132 = vld [vmem:[%s8] sm:$0x1]
    %v1137 = vrot.slane %v1080, 1
    %v1138 = vrot.slane %v1081, 1
    %v1139 = vsel %vm320, %v1137, %v1138
    %v1140 = vrot.slane %v1082, 1
    %v1141 = vsel %vm320, %v1138, %v1140
    %v1142 = vrot.slane %v1083, 1
    %v1143 = vsel %vm320, %v1140, %v1142
    %v1144 = vsel %vm320, %v1142, %v328
    %v1149 = vrot.slane %v1080, 2
    %v1150 = vrot.slane %v1081, 2
    %v1151 = vsel %vm342, %v1149, %v1150
    %v1152 = vrot.slane %v1082, 2
    %v1153 = vsel %vm342, %v1150, %v1152
    %v1154 = vrot.slane %v1083, 2
    %v1155 = vsel %vm342, %v1152, %v1154
    %v1156 = vsel %vm342, %v1154, %v350
    %v1162 = vlaneseq
    %v1163 = vshrl.u32 %v1162, 7
    %v1164 = vsub.s32 0, %v1163
    %v1165 = vrot.slane %v1132, %v1164
    %1167 = vmatprep.subr.mxu0 0.0
    %1168 = vmatpush1.msra.mxu0 %v1084
    %1169 = vmatprep.subr.mxu0 0.0
    %1170 = vmatpush1.msra.mxu0 %v1085
    %1171 = vmatprep.subr.mxu0 0.0
    %1172 = vmatpush1.msra.mxu0 %v1086
    %1173 = vmatprep.subr.mxu0 0.0
    %1174 = vmatpush1.msra.mxu0 %v1087
    %1175 = vmatprep.subr.mxu0 0.0
    %1176 = vmatpush1.msra.mxu0 %v1088
    %1177 = vmatprep.subr.mxu0 0.0
    %1178 = vmatpush1.msra.mxu0 %v1089
    %1179 = vmatprep.subr.mxu0 0.0
    %1180 = vmatpush1.msra.mxu0 %v1090
    %1181 = vmatprep.subr.mxu0 0.0
    %1182 = vmatpush1.msra.mxu0 %v1091
    %1183 = vmatprep.subr.mxu0 0.0
    %1184 = vmatpush1.msra.mxu0 %v1092
    %1185 = vmatprep.subr.mxu0 0.0
    %1186 = vmatpush1.msra.mxu0 %v1093
    %1187 = vmatprep.subr.mxu0 0.0
    %1188 = vmatpush1.msra.mxu0 %v1094
    %1189 = vmatprep.subr.mxu0 0.0
    %1190 = vmatpush1.msra.mxu0 %v1095
    %1191 = vmatprep.subr.mxu0 0.0
    %1192 = vmatpush1.msra.mxu0 %v1096
    %1193 = vmatprep.subr.mxu0 0.0
    %1194 = vmatpush1.msra.mxu0 %v1097
    %1195 = vmatprep.subr.mxu0 0.0
    %1196 = vmatpush1.msra.mxu0 %v1098
    %1197 = vmatprep.subr.mxu0 0.0
    %1198 = vmatpush1.msra.mxu0 %v1099
    %1199 = vmatprep.subr.mxu0 0.0
    %1200 = vmatpush1.msra.mxu0 %v1100
    %1201 = vmatprep.subr.mxu0 0.0
    %1202 = vmatpush1.msra.mxu0 %v1101
    %1203 = vmatprep.subr.mxu0 0.0
    %1204 = vmatpush1.msra.mxu0 %v1102
    %1205 = vmatprep.subr.mxu0 0.0
    %1206 = vmatpush1.msra.mxu0 %v1103
    %1207 = vmatprep.subr.mxu0 0.0
    %1208 = vmatpush1.msra.mxu0 %v1104
    %1209 = vmatprep.subr.mxu0 0.0
    %1210 = vmatpush1.msra.mxu0 %v1105
    %1211 = vmatprep.subr.mxu0 0.0
    %1212 = vmatpush1.msra.mxu0 %v1106
    %1213 = vmatprep.subr.mxu0 0.0
    %1214 = vmatpush1.msra.mxu0 %v1107
    %1215 = vmatprep.subr.mxu0 0.0
    %1216 = vmatpush1.msra.mxu0 %v1108
    %1217 = vmatprep.subr.mxu0 0.0
    %1218 = vmatpush1.msra.mxu0 %v1109
    %1219 = vmatprep.subr.mxu0 0.0
    %1220 = vmatpush1.msra.mxu0 %v1110
    %1221 = vmatprep.subr.mxu0 0.0
    %1222 = vmatpush1.msra.mxu0 %v1111
    %1223 = vmatprep.subr.mxu0 0.0
    %1224 = vmatpush1.msra.mxu0 %v1112
    %1225 = vmatprep.subr.mxu0 0.0
    %1226 = vmatpush1.msra.mxu0 %v1113
    %1227 = vmatprep.subr.mxu0 0.0
    %1228 = vmatpush1.msra.mxu0 %v1114
    %1229 = vmatprep.subr.mxu0 0.0
    %1230 = vmatpush1.msra.mxu0 %v1115
    %1231 = vmatprep.mubr.f32.mxu0 %v1139
    %1232 = vmatmul.mubr.f32.gmra.mrb[0].mxu0 %v1080
    %v1233 = vpop.f32.mrb[0].mxu0
    %v1234 = vadd.f32 %v1165, %v1233
    %v1235 = vpop.f32.mrb[0].mxu0
    %1236 = vmatprep.mubr.f32.mxu0 %v1141
    %1237 = vmatmul.mubr.f32.gmra.mrb[0].mxu0 %v1081
    %v1238 = vpop.f32.mrb[0].mxu0
    %v1239 = vadd.f32 %v1165, %v1238
    %v1240 = vpop.f32.mrb[0].mxu0
    %1241 = vmatprep.mubr.f32.mxu0 %v1143
    %1242 = vmatmul.mubr.f32.gmra.mrb[0].mxu0 %v1082
    %v1243 = vpop.f32.mrb[0].mxu0
    %v1244 = vadd.f32 %v1165, %v1243
    %v1245 = vpop.f32.mrb[0].mxu0
    %1246 = vmatprep.mubr.f32.mxu0 %v1144
    %1247 = vmatmul.mubr.f32.gmra.mrb[0].mxu0 %v1083
    %v1248 = vpop.f32.mrb[0].mxu0
    %v1249 = vadd.f32 %v1165, %v1248
    %v1250 = vpop.f32.mrb[0].mxu0
    %1251 = vdwg.mxu0
    %1252 = vmatprep.subr.mxu0 0.0
    %1253 = vmatpush1.msra.mxu0 %v1116
    %1254 = vmatprep.subr.mxu0 0.0
    %1255 = vmatpush1.msra.mxu0 %v1117
    %1256 = vmatprep.subr.mxu0 0.0
    %1257 = vmatpush1.msra.mxu0 %v1118
    %1258 = vmatprep.subr.mxu0 0.0
    %1259 = vmatpush1.msra.mxu0 %v1119
    %1260 = vmatprep.subr.mxu0 0.0
    %1261 = vmatpush1.msra.mxu0 %v1120
    %1262 = vmatprep.subr.mxu0 0.0
    %1263 = vmatpush1.msra.mxu0 %v1121
    %1264 = vmatprep.subr.mxu0 0.0
    %1265 = vmatpush1.msra.mxu0 %v1122
    %1266 = vmatprep.subr.mxu0 0.0
    %1267 = vmatpush1.msra.mxu0 %v1123
    %1268 = vmatprep.subr.mxu0 0.0
    %1269 = vmatpush1.msra.mxu0 %v1124
    %1270 = vmatprep.subr.mxu0 0.0
    %1271 = vmatpush1.msra.mxu0 %v1125
    %1272 = vmatprep.subr.mxu0 0.0
    %1273 = vmatpush1.msra.mxu0 %v1126
    %1274 = vmatprep.subr.mxu0 0.0
    %1275 = vmatpush1.msra.mxu0 %v1127
    %1276 = vmatprep.subr.mxu0 0.0
    %1277 = vmatpush1.msra.mxu0 %v1128
    %1278 = vmatprep.subr.mxu0 0.0
    %1279 = vmatpush1.msra.mxu0 %v1129
    %1280 = vmatprep.subr.mxu0 0.0
    %1281 = vmatpush1.msra.mxu0 %v1130
    %1282 = vmatprep.subr.mxu0 0.0
    %1283 = vmatpush1.msra.mxu0 %v1131
    %1284 = vmatprep.subr.mxu0 0.0
    %1285 = vmatpush1.msra.mxu0 0.0
    %1286 = vmatprep.subr.mxu0 0.0
    %1287 = vmatpush1.msra.mxu0 0.0
    %1288 = vmatprep.subr.mxu0 0.0
    %1289 = vmatpush1.msra.mxu0 0.0
    %1290 = vmatprep.subr.mxu0 0.0
    %1291 = vmatpush1.msra.mxu0 0.0
    %1292 = vmatprep.subr.mxu0 0.0
    %1293 = vmatpush1.msra.mxu0 0.0
    %1294 = vmatprep.subr.mxu0 0.0
    %1295 = vmatpush1.msra.mxu0 0.0
    %1296 = vmatprep.subr.mxu0 0.0
    %1297 = vmatpush1.msra.mxu0 0.0
    %1298 = vmatprep.subr.mxu0 0.0
    %1299 = vmatpush1.msra.mxu0 0.0
    %1300 = vmatprep.subr.mxu0 0.0
    %1301 = vmatpush1.msra.mxu0 0.0
    %1302 = vmatprep.subr.mxu0 0.0
    %1303 = vmatpush1.msra.mxu0 0.0
    %1304 = vmatprep.subr.mxu0 0.0
    %1305 = vmatpush1.msra.mxu0 0.0
    %1306 = vmatprep.subr.mxu0 0.0
    %1307 = vmatpush1.msra.mxu0 0.0
    %1308 = vmatprep.subr.mxu0 0.0
    %1309 = vmatpush1.msra.mxu0 0.0
    %1310 = vmatprep.subr.mxu0 0.0
    %1311 = vmatpush1.msra.mxu0 0.0
    %1312 = vmatprep.subr.mxu0 0.0
    %1313 = vmatpush1.msra.mxu0 0.0
    %1314 = vmatprep.subr.mxu0 0.0
    %1315 = vmatpush1.msra.mxu0 0.0
    %1316 = vmatprep.mubr.f32.mxu0 0.0
    %1317 = vmatmul.mubr.f32.gmra.mrb[0].mxu0 %v1151
    %v1318 = vpop.f32.mrb[0].mxu0
    %v1319 = vadd.f32 %v1234, %v1318
    %v1320 = vpop.f32.mrb[0].mxu0
    %1321 = vmatprep.mubr.f32.mxu0 0.0
    %1322 = vmatmul.mubr.f32.gmra.mrb[0].mxu0 %v1153
    %v1323 = vpop.f32.mrb[0].mxu0
    %v1324 = vadd.f32 %v1239, %v1323
    %v1325 = vpop.f32.mrb[0].mxu0
    %1326 = vmatprep.mubr.f32.mxu0 0.0
    %1327 = vmatmul.mubr.f32.gmra.mrb[0].mxu0 %v1155
    %v1328 = vpop.f32.mrb[0].mxu0
    %v1329 = vadd.f32 %v1244, %v1328
    %v1330 = vpop.f32.mrb[0].mxu0
    %1331 = vmatprep.mubr.f32.mxu0 0.0
    %1332 = vmatmul.mubr.f32.gmra.mrb[0].mxu0 %v1156
    %v1333 = vpop.f32.mrb[0].mxu0
    %v1334 = vadd.f32 %v1249, %v1333
    %v1335 = vpop.f32.mrb[0].mxu0
    %1336 = vdwg.mxu0
    %v1337 = vld [vmem:[%s10] sm:$0xff]
    %v1338 = vld [vmem:[%s10 + $0x8] sm:$0xff]
    %v1343 = vrot.slane %v1319, 1
    %v1344 = vrot.slane %v1324, 1
    %v1345 = vsel %vm320, %v1343, %v1344
    %v1346 = vrot.slane %v1329, 1
    %v1347 = vsel %vm320, %v1344, %v1346
    %v1348 = vrot.slane %v1334, 1
    %v1349 = vsel %vm320, %v1346, %v1348
    %v1350 = vsel %vm320, %v1348, %v328
    %v1355 = vmax.f32 %v1319, %v1345
    %v1356 = vmax.f32 %v1324, %v1347
    %v1357 = vmax.f32 %v1329, %v1349
    %v1358 = vmax.f32 %v1334, %v1350
    %v1360 = vsel %vm364, %v1337, 0
    %v1363 = vsel %vm364, %v1338, 0
    %1365 = vmatprep.subr.mxu0 0.0
    %1366 = vmatpush1.msra.mxu0 %v1355
    %1367 = vmatprep.subr.mxu0 0.0
    %1368 = vmatpush1.msra.mxu0 %v1356
    %1369 = vmatprep.subr.mxu0 0.0
    %1370 = vmatpush1.msra.mxu0 %v1357
    %1371 = vmatprep.subr.mxu0 0.0
    %1372 = vmatpush1.msra.mxu0 %v1358
    %1373 = vmatprep.subr.mxu0 0.0
    %1374 = vmatpush1.msra.mxu0 0.0
    %1375 = vmatprep.subr.mxu0 0.0
    %1376 = vmatpush1.msra.mxu0 0.0
    %1377 = vmatprep.subr.mxu0 0.0
    %1378 = vmatpush1.msra.mxu0 0.0
    %1379 = vmatprep.subr.mxu0 0.0
    %1380 = vmatpush1.msra.mxu0 0.0
    %1381 = vmatprep.subr.mxu0 0.0
    %1382 = vmatpush1.msra.mxu0 0.0
    %1383 = vmatprep.subr.mxu0 0.0
    %1384 = vmatpush1.msra.mxu0 0.0
    %1385 = vmatprep.subr.mxu0 0.0
    %1386 = vmatpush1.msra.mxu0 0.0
    %1387 = vmatprep.subr.mxu0 0.0
    %1388 = vmatpush1.msra.mxu0 0.0
    %1389 = vmatprep.subr.mxu0 0.0
    %1390 = vmatpush1.msra.mxu0 0.0
    %1391 = vmatprep.subr.mxu0 0.0
    %1392 = vmatpush1.msra.mxu0 0.0
    %1393 = vmatprep.subr.mxu0 0.0
    %1394 = vmatpush1.msra.mxu0 0.0
    %1395 = vmatprep.subr.mxu0 0.0
    %1396 = vmatpush1.msra.mxu0 0.0
    %1397 = vmatprep.subr.mxu0 0.0
    %1398 = vmatpush1.msra.mxu0 0.0
    %1399 = vmatprep.subr.mxu0 0.0
    %1400 = vmatpush1.msra.mxu0 0.0
    %1401 = vmatprep.subr.mxu0 0.0
    %1402 = vmatpush1.msra.mxu0 0.0
    %1403 = vmatprep.subr.mxu0 0.0
    %1404 = vmatpush1.msra.mxu0 0.0
    %1405 = vmatprep.subr.mxu0 0.0
    %1406 = vmatpush1.msra.mxu0 0.0
    %1407 = vmatprep.subr.mxu0 0.0
    %1408 = vmatpush1.msra.mxu0 0.0
    %1409 = vmatprep.subr.mxu0 0.0
    %1410 = vmatpush1.msra.mxu0 0.0
    %1411 = vmatprep.subr.mxu0 0.0
    %1412 = vmatpush1.msra.mxu0 0.0
    %1413 = vmatprep.subr.mxu0 0.0
    %1414 = vmatpush1.msra.mxu0 0.0
    %1415 = vmatprep.subr.mxu0 0.0
    %1416 = vmatpush1.msra.mxu0 0.0
    %1417 = vmatprep.subr.mxu0 0.0
    %1418 = vmatpush1.msra.mxu0 0.0
    %1419 = vmatprep.subr.mxu0 0.0
    %1420 = vmatpush1.msra.mxu0 0.0
    %1421 = vmatprep.subr.mxu0 0.0
    %1422 = vmatpush1.msra.mxu0 0.0
    %1423 = vmatprep.subr.mxu0 0.0
    %1424 = vmatpush1.msra.mxu0 0.0
    %1425 = vmatprep.subr.mxu0 0.0
    %1426 = vmatpush1.msra.mxu0 0.0
    %1427 = vmatprep.subr.mxu0 0.0
    %1428 = vmatpush1.msra.mxu0 0.0
    %1429 = vmatprep.mubr.f32.mxu0 0.0
    %1430 = vmatmul.mubr.f32.gmra.mrb[0].mxu0 %v1360
    %v1431 = vpop.f32.mrb[0].mxu0
    %v1432 = vadd.f32 0.0, %v1431
    %v1433 = vpop.f32.mrb[0].mxu0
    %1434 = vmatprep.mubr.f32.mxu0 0.0
    %1435 = vmatmul.mubr.f32.gmra.mrb[0].mxu0 %v1363
    %v1436 = vpop.f32.mrb[0].mxu0
    %v1437 = vadd.f32 0.0, %v1436
    %v1438 = vpop.f32.mrb[0].mxu0
    %1439 = vdwg.mxu0
    %v1440 = vmul.f32 %v1432, 0.5
    %v1441 = vmul.f32 %v1437, 0.5
    %v1442 = vmul.f32 %v1432, 0.70710677
    %v1443 = vmul.f32 %v1437, 0.70710677
    %vm1444 = vcmp.ge.f32.partialorder %v1442, 0.0
    %vm1445 = vcmp.ge.f32.partialorder %v1443, 0.0
    %v1446 = vsel %vm1444, 1.0, -1.0
    %v1447 = vsel %vm1445, 1.0, -1.0
    %v1448 = vand.u32 2147483647, %v1442
    %v1449 = vand.u32 2147483647, %v1443
    %v1450 = vmul.f32 %v1448, 0.3275911
    %v1451 = vmul.f32 %v1449, 0.3275911
    %v1452 = vadd.f32 %v1450, 1.0
    %v1453 = vadd.f32 %v1451, 1.0
    %v1454 = vrcp.pop %v1452
    %v1455 = vmul.f32 1.0, %v1454
    %v1456 = vrcp.pop %v1453
    %v1457 = vmul.f32 1.0, %v1456
    %v1458 = vmul.f32 %v1455, 1.0614054
    %v1459 = vmul.f32 %v1457, 1.0614054
    %v1460 = vadd.f32 %v1458, -1.4531521
    %v1461 = vadd.f32 %v1459, -1.4531521
    %v1462 = vmul.f32 %v1460, %v1455
    %v1463 = vmul.f32 %v1461, %v1457
    %v1464 = vadd.f32 %v1462, 1.4214138
    %v1465 = vadd.f32 %v1463, 1.4214138
    %v1466 = vmul.f32 %v1464, %v1455
    %v1467 = vmul.f32 %v1465, %v1457
    %v1468 = vadd.f32 %v1466, -0.28449672
    %v1469 = vadd.f32 %v1467, -0.28449672
    %v1470 = vmul.f32 %v1468, %v1455
    %v1471 = vmul.f32 %v1469, %v1457
    %v1472 = vadd.f32 %v1470, 0.2548296
    %v1473 = vadd.f32 %v1471, 0.2548296
    %v1474 = vmul.f32 %v1472, %v1455
    %v1475 = vmul.f32 %v1473, %v1457
    %v1476 = vsub.f32 0.0, %v1448
    %v1477 = vsub.f32 0.0, %v1449
    %v1478 = vmul.f32 %v1476, %v1448
    %v1479 = vmul.f32 %v1477, %v1449
    %v1480 = vmul.f32 %v1478, 1.442695
    %v1481 = vpow.pop %v1480
    %v1482 = vmul.f32 %v1479, 1.442695
    %v1483 = vpow.pop %v1482
    %v1484 = vmul.f32 %v1474, %v1481
    %v1485 = vmul.f32 %v1475, %v1483
    %v1486 = vsub.f32 1.0, %v1484
    %v1487 = vsub.f32 1.0, %v1485
    %v1488 = vmul.f32 %v1446, %v1486
    %v1489 = vmul.f32 %v1447, %v1487
    %v1490 = vadd.f32 %v1488, 1.0
    %v1491 = vadd.f32 %v1489, 1.0
    %v1492 = vmul.f32 %v1440, %v1490
    %v1493 = vmul.f32 %v1441, %v1491
    %1494 = vst [vmem:[#allocation8] sm:$0xff] %v1492
    %1495 = vst [vmem:[#allocation8 + $0x8] sm:$0xff] %v1493
    // Predicated region
    $region58: #{tpu_custom_call.1} parent=1 // pred_check
      _
    $region59: #{tpu_custom_call.1} parent=1 // pred_check_branch
      %1497 = sbr.rel (0) target = $region61
    $region60: #{tpu_custom_call.1} parent=1 // pred_region
      %s1499 = ssub.s32 256, 256
      %1500 = vsyncadd [#allocation4], %s1499
      %s1501 = sshll.u32 [#allocation8], 4
      %s1502 = int_to_ptr.vmem [resolvable:$true] %s1501
      %1507 = dma.vmem_to_hbm [thread:$0]  %s1502, 256, %s11, [#allocation4], 128, 128, 8
    $region61: #{tpu_custom_call.1} parent=1 // pred_fallthru
      _
    // Predicated region
    $region62: #{tpu_custom_call.1} parent=1 // pred_check
      _
    $region63: #{tpu_custom_call.1} parent=1 // pred_check_branch
      %1509 = sbr.rel (0) target = $region65
    $region64: #{tpu_custom_call.1} parent=1 // pred_region
      %1510 = dma.done [#allocation4], 256
    $region65: #{tpu_custom_call.1} parent=1 // pred_fallthru
      _
    %1511 = vsyncpa [#allocation3], 1
    %1512 = vsyncpa [#allocation6], 1
    %1513 = vsyncpa [#allocation4], 1

</llo_original>
